<compile_context>
chip_gen: v7x
topology: tpu7x:2x2x1
jax: 0.10.0
libtpu: 0.0.40
codegen_flags: <defaults>
</compile_context>

<pallas_src>
import jax
import jax.numpy as jnp
from jax.experimental import pallas as pl
from jax.experimental.pallas import tpu as pltpu

NEG_SLOPE = 0.01   # torch.nn.LeakyReLU default negative_slope
L2_EPS = 1e-12     # torch.nn.functional.normalize default eps

HIDDEN = 32
MSG_LAYERS = 2
OUT_LANES = 128    # lane-dense output slab width (multiple of 128)


def _round_up(n, m):
    return ((n + m - 1) // m) * m


# ------------------------------------------------------------------ kernel factory
def make_encoder_kernel(w_off, b_idx, n_rows):
    """Build the fused encoder kernel.

    w_off : dict name -> (row_start, row_count) into the bf16 weight slab
            (all blocks 16-row aligned so every static slice is layout-clean).
    b_idx : dict name -> row index into the f32 bias slab.
    n_rows: padded per-node-type row count (Np, multiple of 8).
    """

    def kernel(x_ref, adj_ref, w_ref, b_ref, o_ref):
        def W(name):
            s, n = w_off[name]
            return w_ref[s:s + n, :]                       # bf16 (K, 32)

        def B(name):
            i = b_idx[name]
            return b_ref[i:i + 1, :]                       # f32 (1, 32)

        def leaky(v):                                      # f32 elementwise
            return jnp.where(v > 0, v, NEG_SLOPE * v)

        def dot16(x, w):
            # bf16 MXU operands, f32 accumulate.
            return jnp.dot(x.astype(jnp.bfloat16), w,
                           preferred_element_type=jnp.float32)

        def mlp2(x, pfx, activate_last):
            # Linear -> LeakyReLU -> Linear [-> LeakyReLU]
            h = leaky(dot16(x, W(pfx + '_w1')) + B(pfx + '_b1'))
            o = dot16(h, W(pfx + '_w2')) + B(pfx + '_b2')
            return leaky(o) if activate_last else o

        def sage(adj, h_src, h_dst, pfx):
            # SAGEConv: mean neighbor aggregation via dense row-normalized
            # adjacency, then two K=H matmuls (no lane concat), post_conv
            # LeakyReLU and the 'sum' residual skip.
            agg = jnp.dot(adj, h_src.astype(jnp.bfloat16),
                          preferred_element_type=jnp.float32)
            out = (dot16(agg, W(pfx + '_wl'))
                   + dot16(h_dst, W(pfx + '_wr'))
                   + B(pfx + '_b'))
            return leaky(out) + h_dst

        def l2norm(v):
            # x / max(||x||, eps) == x * rsqrt(max(||x||^2, eps^2))
            ss = jnp.sum(v * v, axis=-1, keepdims=True)
            return v * jax.lax.rsqrt(jnp.maximum(ss, L2_EPS * L2_EPS))

        xu = x_ref[0]          # (Np, Fpad) f32
        xi = x_ref[1]
        adj_ui = adj_ref[0]    # (Np, Np) bf16 : dst user <- src item
        adj_iu = adj_ref[1]    # (Np, Np) bf16 : dst item <- src user

        # pre_mlp (hetero_MLP, activate_last=True)
        hu = mlp2(xu, 'pre_u', True)
        hi = mlp2(xi, 'pre_i', True)

        # msg-passing layer 0 — both dst types read the SAME input dict
        nu = sage(adj_ui, hi, hu, 'c0u')
        ni = sage(adj_iu, hu, hi, 'c0i')
        hu, hi = nu, ni

        # msg-passing layer 1
        nu = sage(adj_ui, hi, hu, 'c1u')
        ni = sage(adj_iu, hu, hi, 'c1i')
        hu, hi = nu, ni

        # post_mlp (activate_last=False) fused with L2 normalize_output
        ou = l2norm(mlp2(hu, 'post_u', False))
        oi = l2norm(mlp2(hi, 'post_i', False))

        # lane-dense single store: (Np, 128) = [user(32) | item(32) | zeros(64)]
        pad = jnp.zeros((n_rows, OUT_LANES - 2 * HIDDEN), jnp.float32)
        o_ref[...] = jnp.concatenate([ou, oi, pad], axis=-1)

    return kernel


# ------------------------------------------------------------------ wrapper
def base_encoder_forward(x_dict, adj_dict, params):
    xu, xi = x_dict['user'], x_dict['item']
    nu, ni = xu.shape[0], xi.shape[0]
    n_rows = _round_up(max(nu, ni), 8)
    f_pad = _round_up(max(xu.shape[1], xi.shape[1]), 16)

    def pad2(a, rows, cols):
        return jnp.pad(a, ((0, rows - a.shape[0]), (0, cols - a.shape[1])))

    # (2, Np, Fpad) f32 feature slab (padded rows/cols are zero)
    x_slab = jnp.stack([pad2(xu, n_rows, f_pad), pad2(xi, n_rows, f_pad)])

    # (2, Np, Np) bf16 normalized-adjacency slab (dominant MXU operand);
    # zero-padded src columns keep padded (garbage) src rows out of real dsts.
    adj_ui = adj_dict[('item', 'rev_rates', 'user')]     # (Nu, Ni)
    adj_iu = adj_dict[('user', 'rates', 'item')]          # (Ni, Nu)
    adj_slab = jnp.stack([pad2(adj_ui, n_rows, n_rows),
                          pad2(adj_iu, n_rows, n_rows)]).astype(jnp.bfloat16)

    # ---- pack all weights into ONE bf16 slab (16-row-aligned blocks) and all
    #      biases into ONE small f32 slab  ->  4 kernel inputs instead of ~32.
    cv = params['conv']
    et_u = ('item', 'rev_rates', 'user')   # conv producing dst 'user'
    et_i = ('user', 'rates', 'item')       # conv producing dst 'item'
    w_named = [
        ('pre_u_w1', pad2(params['pre_mlp']['user']['w1'], f_pad, HIDDEN)),
        ('pre_u_w2', params['pre_mlp']['user']['w2']),
        ('pre_i_w1', pad2(params['pre_mlp']['item']['w1'], f_pad, HIDDEN)),
        ('pre_i_w2', params['pre_mlp']['item']['w2']),
        ('c0u_wl', cv[0][et_u]['wl']), ('c0u_wr', cv[0][et_u]['wr']),
        ('c0i_wl', cv[0][et_i]['wl']), ('c0i_wr', cv[0][et_i]['wr']),
        ('c1u_wl', cv[1][et_u]['wl']), ('c1u_wr', cv[1][et_u]['wr']),
        ('c1i_wl', cv[1][et_i]['wl']), ('c1i_wr', cv[1][et_i]['wr']),
        ('post_u_w1', params['post_mlp']['user']['w1']),
        ('post_u_w2', params['post_mlp']['user']['w2']),
        ('post_i_w1', params['post_mlp']['item']['w1']),
        ('post_i_w2', params['post_mlp']['item']['w2']),
    ]
    w_off, blocks, row = {}, [], 0
    for name, w in w_named:
        r = _round_up(w.shape[0], 16)       # bf16 sublane-pair alignment
        blocks.append(jnp.pad(w, ((0, r - w.shape[0]), (0, 0))))
        w_off[name] = (row, r)
        row += r
    w_slab = jnp.concatenate(blocks, axis=0).astype(jnp.bfloat16)

    b_named = [
        ('pre_u_b1', params['pre_mlp']['user']['b1']),
        ('pre_u_b2', params['pre_mlp']['user']['b2']),
        ('pre_i_b1', params['pre_mlp']['item']['b1']),
        ('pre_i_b2', params['pre_mlp']['item']['b2']),
        ('c0u_b', cv[0][et_u]['b']), ('c0i_b', cv[0][et_i]['b']),
        ('c1u_b', cv[1][et_u]['b']), ('c1i_b', cv[1][et_i]['b']),
        ('post_u_b1', params['post_mlp']['user']['b1']),
        ('post_u_b2', params['post_mlp']['user']['b2']),
        ('post_i_b1', params['post_mlp']['item']['b1']),
        ('post_i_b2', params['post_mlp']['item']['b2']),
    ]
    b_idx = {name: i for i, (name, _) in enumerate(b_named)}
    b_slab = jnp.stack([b for _, b in b_named]).astype(jnp.float32)  # (12, 32)

    kernel = make_encoder_kernel(w_off, b_idx, n_rows)

    # advisory cost estimate so XLA can schedule around the opaque custom call
    mm = 2 * 2 * n_rows * f_pad * HIDDEN + 2 * 2 * n_rows * HIDDEN * HIDDEN   # pre
    mm += MSG_LAYERS * 2 * (2 * n_rows * n_rows * HIDDEN
                            + 2 * 2 * n_rows * HIDDEN * HIDDEN)               # conv
    mm += 2 * 2 * 2 * n_rows * HIDDEN * HIDDEN                                # post
    bytes_accessed = (x_slab.size * 4 + adj_slab.size * 2 + w_slab.size * 2
                      + b_slab.size * 4 + n_rows * OUT_LANES * 4)
    cost = pl.CostEstimate(flops=int(mm), transcendentals=2 * n_rows,
                           bytes_accessed=int(bytes_accessed))

    vmem_spec = pl.BlockSpec(memory_space=pltpu.MemorySpace.VMEM)
    out = pl.pallas_call(
        kernel,
        out_shape=jax.ShapeDtypeStruct((n_rows, OUT_LANES), jnp.float32),
        in_specs=[vmem_spec, vmem_spec, vmem_spec, vmem_spec],
        out_specs=vmem_spec,
        cost_estimate=cost,
        # grid-less: all (tiny) operands resident in VMEM for the fused pass.
        # TODO(synk): add a dst-row-tiled grid (+ "parallel" axis, raised
        #   vmem_limit_bytes) for production graph sizes.
    )(x_slab, adj_slab, w_slab, b_slab)

    return {'user': out[:nu, :HIDDEN], 'item': out[:ni, HIDDEN:2 * HIDDEN]}


# ------------------------------------------------------------------ glue
def mean_adjacency(edge_index, n_dst, n_src):
    """Dense row-normalized adjacency: A[i, j] = (#edges j->i) / in_degree(i)."""
    src, dst = edge_index
    a = jnp.zeros((n_dst, n_src), jnp.float32).at[dst, src].add(1.0)
    deg = jnp.sum(a, axis=1, keepdims=True)
    return a / jnp.maximum(deg, 1.0)


def linear_init(key, fan_in, fan_out):
    kw, kb = jax.random.split(key)
    bound = 1.0 / float(fan_in) ** 0.5
    w = jax.random.uniform(kw, (fan_in, fan_out), jnp.float32, -bound, bound)
    b = jax.random.uniform(kb, (fan_out,), jnp.float32, -bound, bound)
    return w, b


def init_params(key, feat_dims, edge_types):
    params = {'pre_mlp': {}, 'post_mlp': {}, 'conv': []}
    for nt, F in feat_dims.items():
        key, k1, k2 = jax.random.split(key, 3)
        w1, b1 = linear_init(k1, F, HIDDEN)
        w2, b2 = linear_init(k2, HIDDEN, HIDDEN)
        params['pre_mlp'][nt] = dict(w1=w1, b1=b1, w2=w2, b2=b2)
    for _ in range(MSG_LAYERS):
        layer = {}
        for et in edge_types:
            key, k1, k2 = jax.random.split(key, 3)
            wl, _ = linear_init(k1, HIDDEN, HIDDEN)
            wr, b = linear_init(k2, HIDDEN, HIDDEN)
            layer[et] = dict(wl=wl, wr=wr, b=b)
        params['conv'].append(layer)
    for nt in feat_dims:
        key, k1, k2 = jax.random.split(key, 3)
        w1, b1 = linear_init(k1, HIDDEN, HIDDEN)
        w2, b2 = linear_init(k2, HIDDEN, HIDDEN)
        params['post_mlp'][nt] = dict(w1=w1, b1=b1, w2=w2, b2=b2)
    return params


# Pure-JAX f32 reference (same math, un-fused) used only for correctness check.
def reference_forward(x_dict, adj_dict, params):
    def leaky(x):
        return jnp.where(x > 0, x, NEG_SLOPE * x)

    def mlp2(x, p, act):
        h = leaky(x @ p['w1'] + p['b1'])
        o = h @ p['w2'] + p['b2']
        return leaky(o) if act else o

    h = {nt: mlp2(x, params['pre_mlp'][nt], True) for nt, x in x_dict.items()}
    for l in range(MSG_LAYERS):
        new_h = {}
        for (s, r, d), adj in adj_dict.items():
            p = params['conv'][l][(s, r, d)]
            out = (adj @ h[s]) @ p['wl'] + h[d] @ p['wr'] + p['b']
            new_h[d] = leaky(out) + h[d]
        h = new_h
    out = {}
    for nt in x_dict:
        o = mlp2(h[nt], params['post_mlp'][nt], False)
        n = jnp.linalg.norm(o, axis=-1, keepdims=True)
        out[nt] = o / jnp.maximum(n, L2_EPS)
    return out


# ------------------------------------------------------------------ main
if __name__ == "__main__":
    key = jax.random.PRNGKey(0)
    kxu, kxi, kes, ked, kp = jax.random.split(key, 5)

    N_USER, F_USER = 12, 10
    N_ITEM, F_ITEM = 16, 6
    N_EDGES = 40

    x_dict = {
        'user': jax.random.normal(kxu, (N_USER, F_USER), jnp.float32),
        'item': jax.random.normal(kxi, (N_ITEM, F_ITEM), jnp.float32),
    }
    num_nodes = {'user': N_USER, 'item': N_ITEM}

    src_u = jax.random.randint(kes, (N_EDGES,), 0, N_USER)
    dst_i = jax.random.randint(ked, (N_EDGES,), 0, N_ITEM)
    edge_index_dict = {
        ('user', 'rates', 'item'): (src_u, dst_i),
        ('item', 'rev_rates', 'user'): (dst_i, src_u),
    }
    edge_types = list(edge_index_dict.keys())

    # Adjacencies built ONCE (hoisted; layer-invariant).
    adj_dict = {
        (s, r, d): mean_adjacency(ei, num_nodes[d], num_nodes[s])
        for (s, r, d), ei in edge_index_dict.items()
    }

    params = init_params(kp, {'user': F_USER, 'item': F_ITEM}, edge_types)

    out = base_encoder_forward(x_dict, adj_dict, params)
    out = jax.tree_util.tree_map(jax.block_until_ready, out)

    assert out['user'].shape == (N_USER, HIDDEN)
    assert out['item'].shape == (N_ITEM, HIDDEN)

    # normalize_output check: unit L2 norm along last dim
    for v in out.values():
        norms = jnp.linalg.norm(v, axis=-1)
        assert bool(jnp.all(jnp.abs(norms - 1.0) < 1e-3))

    # numerical check vs f32 reference (tolerance loosened for bf16 MXU operands)
    ref = reference_forward(x_dict, adj_dict, params)
    for nt in out:
        err = float(jnp.max(jnp.abs(out[nt] - ref[nt])))
        assert err < 3e-2, f"{nt} mismatch vs reference: {err}"

    print("KERNEL_OK")
</pallas_src>

<mosaic_0001>
module attributes {stable_mosaic.version = 11 : i64} {
  func.func @kernel(%arg0: memref<2x16x16xf32, #tpu.memory_space<vmem>>, %arg1: memref<2x16x16xbf16, #tpu.memory_space<vmem>>, %arg2: memref<480x32xbf16, #tpu.memory_space<vmem>>, %arg3: memref<12x32xf32, #tpu.memory_space<vmem>>, %arg4: memref<16x128xf32, #tpu.memory_space<vmem>>) attributes {dimension_semantics = [], scalar_prefetch = 0 : i64, scratch_operands = 0 : i64, tpu.core_type = #tpu.core_type<tc>} {
    %c0 = arith.constant 0 : index
    %c0_0 = arith.constant 0 : index
    %c0_1 = arith.constant 0 : index
    %0 = vector.load %arg0[%c0, %c0_0, %c0_1] : memref<2x16x16xf32, #tpu.memory_space<vmem>>, vector<1x16x16xf32>
    %1 = vector.shape_cast %0 : vector<1x16x16xf32> to vector<16x16xf32>
    %c1 = arith.constant 1 : index
    %c0_2 = arith.constant 0 : index
    %c0_3 = arith.constant 0 : index
    %2 = vector.load %arg0[%c1, %c0_2, %c0_3] : memref<2x16x16xf32, #tpu.memory_space<vmem>>, vector<1x16x16xf32>
    %3 = vector.shape_cast %2 : vector<1x16x16xf32> to vector<16x16xf32>
    %c0_4 = arith.constant 0 : index
    %c0_5 = arith.constant 0 : index
    %c0_6 = arith.constant 0 : index
    %4 = vector.load %arg1[%c0_4, %c0_5, %c0_6] : memref<2x16x16xbf16, #tpu.memory_space<vmem>>, vector<1x16x16xbf16>
    %5 = vector.shape_cast %4 : vector<1x16x16xbf16> to vector<16x16xbf16>
    %c1_7 = arith.constant 1 : index
    %c0_8 = arith.constant 0 : index
    %c0_9 = arith.constant 0 : index
    %6 = vector.load %arg1[%c1_7, %c0_8, %c0_9] : memref<2x16x16xbf16, #tpu.memory_space<vmem>>, vector<1x16x16xbf16>
    %7 = vector.shape_cast %6 : vector<1x16x16xbf16> to vector<16x16xbf16>
    %c0_10 = arith.constant 0 : index
    %c0_11 = arith.constant 0 : index
    %8 = vector.load %arg2[%c0_10, %c0_11] : memref<480x32xbf16, #tpu.memory_space<vmem>>, vector<16x32xbf16>
    %9 = arith.truncf %1 : vector<16x16xf32> to vector<16x16xbf16>
    %cst = arith.constant dense<0.000000e+00> : vector<16x32xf32>
    %10 = tpu.matmul %9, %8, %cst {dimension_numbers = #tpu.dot_dimension_numbers<[1], [0], [0], [1], [0, 0, 1, 1], [], []>} : vector<16x16xbf16>, vector<16x32xbf16>, vector<16x32xf32> -> vector<16x32xf32>
    %c0_12 = arith.constant 0 : index
    %c0_13 = arith.constant 0 : index
    %11 = vector.load %arg3[%c0_12, %c0_13] : memref<12x32xf32, #tpu.memory_space<vmem>>, vector<1x32xf32>
    %12 = vector.broadcast %11 : vector<1x32xf32> to vector<16x32xf32>
    %13 = arith.addf %10, %12 : vector<16x32xf32>
    %cst_14 = arith.constant 0.000000e+00 : f32
    %14 = vector.broadcast %cst_14 : f32 to vector<16x32xf32>
    %15 = arith.cmpf ogt, %13, %14 : vector<16x32xf32>
    %cst_15 = arith.constant 0.00999999977 : f32
    %16 = vector.broadcast %cst_15 : f32 to vector<16x32xf32>
    %17 = arith.mulf %16, %13 : vector<16x32xf32>
    %18 = arith.select %15, %13, %17 : vector<16x32xi1>, vector<16x32xf32>
    %c16 = arith.constant 16 : index
    %c0_16 = arith.constant 0 : index
    %19 = vector.load %arg2[%c16, %c0_16] : memref<480x32xbf16, #tpu.memory_space<vmem>>, vector<32x32xbf16>
    %20 = arith.truncf %18 : vector<16x32xf32> to vector<16x32xbf16>
    %cst_17 = arith.constant dense<0.000000e+00> : vector<16x32xf32>
    %21 = tpu.matmul %20, %19, %cst_17 {dimension_numbers = #tpu.dot_dimension_numbers<[1], [0], [0], [1], [0, 0, 1, 1], [], []>} : vector<16x32xbf16>, vector<32x32xbf16>, vector<16x32xf32> -> vector<16x32xf32>
    %c1_18 = arith.constant 1 : index
    %c0_19 = arith.constant 0 : index
    %22 = vector.load %arg3[%c1_18, %c0_19] : memref<12x32xf32, #tpu.memory_space<vmem>>, vector<1x32xf32>
    %23 = vector.broadcast %22 : vector<1x32xf32> to vector<16x32xf32>
    %24 = arith.addf %21, %23 : vector<16x32xf32>
    %cst_20 = arith.constant 0.000000e+00 : f32
    %25 = vector.broadcast %cst_20 : f32 to vector<16x32xf32>
    %26 = arith.cmpf ogt, %24, %25 : vector<16x32xf32>
    %cst_21 = arith.constant 0.00999999977 : f32
    %27 = vector.broadcast %cst_21 : f32 to vector<16x32xf32>
    %28 = arith.mulf %27, %24 : vector<16x32xf32>
    %29 = arith.select %26, %24, %28 : vector<16x32xi1>, vector<16x32xf32>
    %c48 = arith.constant 48 : index
    %c0_22 = arith.constant 0 : index
    %30 = vector.load %arg2[%c48, %c0_22] : memref<480x32xbf16, #tpu.memory_space<vmem>>, vector<16x32xbf16>
    %31 = arith.truncf %3 : vector<16x16xf32> to vector<16x16xbf16>
    %cst_23 = arith.constant dense<0.000000e+00> : vector<16x32xf32>
    %32 = tpu.matmul %31, %30, %cst_23 {dimension_numbers = #tpu.dot_dimension_numbers<[1], [0], [0], [1], [0, 0, 1, 1], [], []>} : vector<16x16xbf16>, vector<16x32xbf16>, vector<16x32xf32> -> vector<16x32xf32>
    %c2 = arith.constant 2 : index
    %c0_24 = arith.constant 0 : index
    %33 = vector.load %arg3[%c2, %c0_24] : memref<12x32xf32, #tpu.memory_space<vmem>>, vector<1x32xf32>
    %34 = vector.broadcast %33 : vector<1x32xf32> to vector<16x32xf32>
    %35 = arith.addf %32, %34 : vector<16x32xf32>
    %cst_25 = arith.constant 0.000000e+00 : f32
    %36 = vector.broadcast %cst_25 : f32 to vector<16x32xf32>
    %37 = arith.cmpf ogt, %35, %36 : vector<16x32xf32>
    %cst_26 = arith.constant 0.00999999977 : f32
    %38 = vector.broadcast %cst_26 : f32 to vector<16x32xf32>
    %39 = arith.mulf %38, %35 : vector<16x32xf32>
    %40 = arith.select %37, %35, %39 : vector<16x32xi1>, vector<16x32xf32>
    %c64 = arith.constant 64 : index
    %c0_27 = arith.constant 0 : index
    %41 = vector.load %arg2[%c64, %c0_27] : memref<480x32xbf16, #tpu.memory_space<vmem>>, vector<32x32xbf16>
    %42 = arith.truncf %40 : vector<16x32xf32> to vector<16x32xbf16>
    %cst_28 = arith.constant dense<0.000000e+00> : vector<16x32xf32>
    %43 = tpu.matmul %42, %41, %cst_28 {dimension_numbers = #tpu.dot_dimension_numbers<[1], [0], [0], [1], [0, 0, 1, 1], [], []>} : vector<16x32xbf16>, vector<32x32xbf16>, vector<16x32xf32> -> vector<16x32xf32>
    %c3 = arith.constant 3 : index
    %c0_29 = arith.constant 0 : index
    %44 = vector.load %arg3[%c3, %c0_29] : memref<12x32xf32, #tpu.memory_space<vmem>>, vector<1x32xf32>
    %45 = vector.broadcast %44 : vector<1x32xf32> to vector<16x32xf32>
    %46 = arith.addf %43, %45 : vector<16x32xf32>
    %cst_30 = arith.constant 0.000000e+00 : f32
    %47 = vector.broadcast %cst_30 : f32 to vector<16x32xf32>
    %48 = arith.cmpf ogt, %46, %47 : vector<16x32xf32>
    %cst_31 = arith.constant 0.00999999977 : f32
    %49 = vector.broadcast %cst_31 : f32 to vector<16x32xf32>
    %50 = arith.mulf %49, %46 : vector<16x32xf32>
    %51 = arith.select %48, %46, %50 : vector<16x32xi1>, vector<16x32xf32>
    %52 = arith.truncf %51 : vector<16x32xf32> to vector<16x32xbf16>
    %cst_32 = arith.constant dense<0.000000e+00> : vector<16x32xf32>
    %53 = tpu.matmul %5, %52, %cst_32 {dimension_numbers = #tpu.dot_dimension_numbers<[1], [0], [0], [1], [0, 0, 1, 1], [], []>} : vector<16x16xbf16>, vector<16x32xbf16>, vector<16x32xf32> -> vector<16x32xf32>
    %c96 = arith.constant 96 : index
    %c0_33 = arith.constant 0 : index
    %54 = vector.load %arg2[%c96, %c0_33] : memref<480x32xbf16, #tpu.memory_space<vmem>>, vector<32x32xbf16>
    %55 = arith.truncf %53 : vector<16x32xf32> to vector<16x32xbf16>
    %cst_34 = arith.constant dense<0.000000e+00> : vector<16x32xf32>
    %56 = tpu.matmul %55, %54, %cst_34 {dimension_numbers = #tpu.dot_dimension_numbers<[1], [0], [0], [1], [0, 0, 1, 1], [], []>} : vector<16x32xbf16>, vector<32x32xbf16>, vector<16x32xf32> -> vector<16x32xf32>
    %c128 = arith.constant 128 : index
    %c0_35 = arith.constant 0 : index
    %57 = vector.load %arg2[%c128, %c0_35] : memref<480x32xbf16, #tpu.memory_space<vmem>>, vector<32x32xbf16>
    %58 = arith.truncf %29 : vector<16x32xf32> to vector<16x32xbf16>
    %cst_36 = arith.constant dense<0.000000e+00> : vector<16x32xf32>
    %59 = tpu.matmul %58, %57, %cst_36 {dimension_numbers = #tpu.dot_dimension_numbers<[1], [0], [0], [1], [0, 0, 1, 1], [], []>} : vector<16x32xbf16>, vector<32x32xbf16>, vector<16x32xf32> -> vector<16x32xf32>
    %60 = arith.addf %56, %59 : vector<16x32xf32>
    %c4 = arith.constant 4 : index
    %c0_37 = arith.constant 0 : index
    %61 = vector.load %arg3[%c4, %c0_37] : memref<12x32xf32, #tpu.memory_space<vmem>>, vector<1x32xf32>
    %62 = vector.broadcast %61 : vector<1x32xf32> to vector<16x32xf32>
    %63 = arith.addf %60, %62 : vector<16x32xf32>
    %cst_38 = arith.constant 0.000000e+00 : f32
    %64 = vector.broadcast %cst_38 : f32 to vector<16x32xf32>
    %65 = arith.cmpf ogt, %63, %64 : vector<16x32xf32>
    %cst_39 = arith.constant 0.00999999977 : f32
    %66 = vector.broadcast %cst_39 : f32 to vector<16x32xf32>
    %67 = arith.mulf %66, %63 : vector<16x32xf32>
    %68 = arith.select %65, %63, %67 : vector<16x32xi1>, vector<16x32xf32>
    %69 = arith.addf %68, %29 : vector<16x32xf32>
    %70 = arith.truncf %29 : vector<16x32xf32> to vector<16x32xbf16>
    %cst_40 = arith.constant dense<0.000000e+00> : vector<16x32xf32>
    %71 = tpu.matmul %7, %70, %cst_40 {dimension_numbers = #tpu.dot_dimension_numbers<[1], [0], [0], [1], [0, 0, 1, 1], [], []>} : vector<16x16xbf16>, vector<16x32xbf16>, vector<16x32xf32> -> vector<16x32xf32>
    %c160 = arith.constant 160 : index
    %c0_41 = arith.constant 0 : index
    %72 = vector.load %arg2[%c160, %c0_41] : memref<480x32xbf16, #tpu.memory_space<vmem>>, vector<32x32xbf16>
    %73 = arith.truncf %71 : vector<16x32xf32> to vector<16x32xbf16>
    %cst_42 = arith.constant dense<0.000000e+00> : vector<16x32xf32>
    %74 = tpu.matmul %73, %72, %cst_42 {dimension_numbers = #tpu.dot_dimension_numbers<[1], [0], [0], [1], [0, 0, 1, 1], [], []>} : vector<16x32xbf16>, vector<32x32xbf16>, vector<16x32xf32> -> vector<16x32xf32>
    %c192 = arith.constant 192 : index
    %c0_43 = arith.constant 0 : index
    %75 = vector.load %arg2[%c192, %c0_43] : memref<480x32xbf16, #tpu.memory_space<vmem>>, vector<32x32xbf16>
    %76 = arith.truncf %51 : vector<16x32xf32> to vector<16x32xbf16>
    %cst_44 = arith.constant dense<0.000000e+00> : vector<16x32xf32>
    %77 = tpu.matmul %76, %75, %cst_44 {dimension_numbers = #tpu.dot_dimension_numbers<[1], [0], [0], [1], [0, 0, 1, 1], [], []>} : vector<16x32xbf16>, vector<32x32xbf16>, vector<16x32xf32> -> vector<16x32xf32>
    %78 = arith.addf %74, %77 : vector<16x32xf32>
    %c5 = arith.constant 5 : index
    %c0_45 = arith.constant 0 : index
    %79 = vector.load %arg3[%c5, %c0_45] : memref<12x32xf32, #tpu.memory_space<vmem>>, vector<1x32xf32>
    %80 = vector.broadcast %79 : vector<1x32xf32> to vector<16x32xf32>
    %81 = arith.addf %78, %80 : vector<16x32xf32>
    %cst_46 = arith.constant 0.000000e+00 : f32
    %82 = vector.broadcast %cst_46 : f32 to vector<16x32xf32>
    %83 = arith.cmpf ogt, %81, %82 : vector<16x32xf32>
    %cst_47 = arith.constant 0.00999999977 : f32
    %84 = vector.broadcast %cst_47 : f32 to vector<16x32xf32>
    %85 = arith.mulf %84, %81 : vector<16x32xf32>
    %86 = arith.select %83, %81, %85 : vector<16x32xi1>, vector<16x32xf32>
    %87 = arith.addf %86, %51 : vector<16x32xf32>
    %88 = arith.truncf %87 : vector<16x32xf32> to vector<16x32xbf16>
    %cst_48 = arith.constant dense<0.000000e+00> : vector<16x32xf32>
    %89 = tpu.matmul %5, %88, %cst_48 {dimension_numbers = #tpu.dot_dimension_numbers<[1], [0], [0], [1], [0, 0, 1, 1], [], []>} : vector<16x16xbf16>, vector<16x32xbf16>, vector<16x32xf32> -> vector<16x32xf32>
    %c224 = arith.constant 224 : index
    %c0_49 = arith.constant 0 : index
    %90 = vector.load %arg2[%c224, %c0_49] : memref<480x32xbf16, #tpu.memory_space<vmem>>, vector<32x32xbf16>
    %91 = arith.truncf %89 : vector<16x32xf32> to vector<16x32xbf16>
    %cst_50 = arith.constant dense<0.000000e+00> : vector<16x32xf32>
    %92 = tpu.matmul %91, %90, %cst_50 {dimension_numbers = #tpu.dot_dimension_numbers<[1], [0], [0], [1], [0, 0, 1, 1], [], []>} : vector<16x32xbf16>, vector<32x32xbf16>, vector<16x32xf32> -> vector<16x32xf32>
    %c256 = arith.constant 256 : index
    %c0_51 = arith.constant 0 : index
    %93 = vector.load %arg2[%c256, %c0_51] : memref<480x32xbf16, #tpu.memory_space<vmem>>, vector<32x32xbf16>
    %94 = arith.truncf %69 : vector<16x32xf32> to vector<16x32xbf16>
    %cst_52 = arith.constant dense<0.000000e+00> : vector<16x32xf32>
    %95 = tpu.matmul %94, %93, %cst_52 {dimension_numbers = #tpu.dot_dimension_numbers<[1], [0], [0], [1], [0, 0, 1, 1], [], []>} : vector<16x32xbf16>, vector<32x32xbf16>, vector<16x32xf32> -> vector<16x32xf32>
    %96 = arith.addf %92, %95 : vector<16x32xf32>
    %c6 = arith.constant 6 : index
    %c0_53 = arith.constant 0 : index
    %97 = vector.load %arg3[%c6, %c0_53] : memref<12x32xf32, #tpu.memory_space<vmem>>, vector<1x32xf32>
    %98 = vector.broadcast %97 : vector<1x32xf32> to vector<16x32xf32>
    %99 = arith.addf %96, %98 : vector<16x32xf32>
    %cst_54 = arith.constant 0.000000e+00 : f32
    %100 = vector.broadcast %cst_54 : f32 to vector<16x32xf32>
    %101 = arith.cmpf ogt, %99, %100 : vector<16x32xf32>
    %cst_55 = arith.constant 0.00999999977 : f32
    %102 = vector.broadcast %cst_55 : f32 to vector<16x32xf32>
    %103 = arith.mulf %102, %99 : vector<16x32xf32>
    %104 = arith.select %101, %99, %103 : vector<16x32xi1>, vector<16x32xf32>
    %105 = arith.addf %104, %69 : vector<16x32xf32>
    %106 = arith.truncf %69 : vector<16x32xf32> to vector<16x32xbf16>
    %cst_56 = arith.constant dense<0.000000e+00> : vector<16x32xf32>
    %107 = tpu.matmul %7, %106, %cst_56 {dimension_numbers = #tpu.dot_dimension_numbers<[1], [0], [0], [1], [0, 0, 1, 1], [], []>} : vector<16x16xbf16>, vector<16x32xbf16>, vector<16x32xf32> -> vector<16x32xf32>
    %c288 = arith.constant 288 : index
    %c0_57 = arith.constant 0 : index
    %108 = vector.load %arg2[%c288, %c0_57] : memref<480x32xbf16, #tpu.memory_space<vmem>>, vector<32x32xbf16>
    %109 = arith.truncf %107 : vector<16x32xf32> to vector<16x32xbf16>
    %cst_58 = arith.constant dense<0.000000e+00> : vector<16x32xf32>
    %110 = tpu.matmul %109, %108, %cst_58 {dimension_numbers = #tpu.dot_dimension_numbers<[1], [0], [0], [1], [0, 0, 1, 1], [], []>} : vector<16x32xbf16>, vector<32x32xbf16>, vector<16x32xf32> -> vector<16x32xf32>
    %c320 = arith.constant 320 : index
    %c0_59 = arith.constant 0 : index
    %111 = vector.load %arg2[%c320, %c0_59] : memref<480x32xbf16, #tpu.memory_space<vmem>>, vector<32x32xbf16>
    %112 = arith.truncf %87 : vector<16x32xf32> to vector<16x32xbf16>
    %cst_60 = arith.constant dense<0.000000e+00> : vector<16x32xf32>
    %113 = tpu.matmul %112, %111, %cst_60 {dimension_numbers = #tpu.dot_dimension_numbers<[1], [0], [0], [1], [0, 0, 1, 1], [], []>} : vector<16x32xbf16>, vector<32x32xbf16>, vector<16x32xf32> -> vector<16x32xf32>
    %114 = arith.addf %110, %113 : vector<16x32xf32>
    %c7 = arith.constant 7 : index
    %c0_61 = arith.constant 0 : index
    %115 = vector.load %arg3[%c7, %c0_61] : memref<12x32xf32, #tpu.memory_space<vmem>>, vector<1x32xf32>
    %116 = vector.broadcast %115 : vector<1x32xf32> to vector<16x32xf32>
    %117 = arith.addf %114, %116 : vector<16x32xf32>
    %cst_62 = arith.constant 0.000000e+00 : f32
    %118 = vector.broadcast %cst_62 : f32 to vector<16x32xf32>
    %119 = arith.cmpf ogt, %117, %118 : vector<16x32xf32>
    %cst_63 = arith.constant 0.00999999977 : f32
    %120 = vector.broadcast %cst_63 : f32 to vector<16x32xf32>
    %121 = arith.mulf %120, %117 : vector<16x32xf32>
    %122 = arith.select %119, %117, %121 : vector<16x32xi1>, vector<16x32xf32>
    %123 = arith.addf %122, %87 : vector<16x32xf32>
    %c352 = arith.constant 352 : index
    %c0_64 = arith.constant 0 : index
    %124 = vector.load %arg2[%c352, %c0_64] : memref<480x32xbf16, #tpu.memory_space<vmem>>, vector<32x32xbf16>
    %125 = arith.truncf %105 : vector<16x32xf32> to vector<16x32xbf16>
    %cst_65 = arith.constant dense<0.000000e+00> : vector<16x32xf32>
    %126 = tpu.matmul %125, %124, %cst_65 {dimension_numbers = #tpu.dot_dimension_numbers<[1], [0], [0], [1], [0, 0, 1, 1], [], []>} : vector<16x32xbf16>, vector<32x32xbf16>, vector<16x32xf32> -> vector<16x32xf32>
    %c8 = arith.constant 8 : index
    %c0_66 = arith.constant 0 : index
    %127 = vector.load %arg3[%c8, %c0_66] : memref<12x32xf32, #tpu.memory_space<vmem>>, vector<1x32xf32>
    %128 = vector.broadcast %127 : vector<1x32xf32> to vector<16x32xf32>
    %129 = arith.addf %126, %128 : vector<16x32xf32>
    %cst_67 = arith.constant 0.000000e+00 : f32
    %130 = vector.broadcast %cst_67 : f32 to vector<16x32xf32>
    %131 = arith.cmpf ogt, %129, %130 : vector<16x32xf32>
    %cst_68 = arith.constant 0.00999999977 : f32
    %132 = vector.broadcast %cst_68 : f32 to vector<16x32xf32>
    %133 = arith.mulf %132, %129 : vector<16x32xf32>
    %134 = arith.select %131, %129, %133 : vector<16x32xi1>, vector<16x32xf32>
    %c384 = arith.constant 384 : index
    %c0_69 = arith.constant 0 : index
    %135 = vector.load %arg2[%c384, %c0_69] : memref<480x32xbf16, #tpu.memory_space<vmem>>, vector<32x32xbf16>
    %136 = arith.truncf %134 : vector<16x32xf32> to vector<16x32xbf16>
    %cst_70 = arith.constant dense<0.000000e+00> : vector<16x32xf32>
    %137 = tpu.matmul %136, %135, %cst_70 {dimension_numbers = #tpu.dot_dimension_numbers<[1], [0], [0], [1], [0, 0, 1, 1], [], []>} : vector<16x32xbf16>, vector<32x32xbf16>, vector<16x32xf32> -> vector<16x32xf32>
    %c9 = arith.constant 9 : index
    %c0_71 = arith.constant 0 : index
    %138 = vector.load %arg3[%c9, %c0_71] : memref<12x32xf32, #tpu.memory_space<vmem>>, vector<1x32xf32>
    %139 = vector.broadcast %138 : vector<1x32xf32> to vector<16x32xf32>
    %140 = arith.addf %137, %139 : vector<16x32xf32>
    %141 = arith.mulf %140, %140 : vector<16x32xf32>
    %cst_72 = arith.constant dense<0.000000e+00> : vector<16xf32>
    %142 = vector.multi_reduction <add>, %141, %cst_72 [1] : vector<16x32xf32> to vector<16xf32>
    %143 = vector.shape_cast %142 : vector<16xf32> to vector<16x1xf32>
    %cst_73 = arith.constant 1.000000e-24 : f32
    %144 = vector.broadcast %cst_73 : f32 to vector<16x1xf32>
    %145 = arith.maximumf %143, %144 : vector<16x1xf32>
    %146 = math.rsqrt %145 : vector<16x1xf32>
    %147 = vector.broadcast %146 : vector<16x1xf32> to vector<16x32xf32>
    %148 = arith.mulf %140, %147 : vector<16x32xf32>
    %c416 = arith.constant 416 : index
    %c0_74 = arith.constant 0 : index
    %149 = vector.load %arg2[%c416, %c0_74] : memref<480x32xbf16, #tpu.memory_space<vmem>>, vector<32x32xbf16>
    %150 = arith.truncf %123 : vector<16x32xf32> to vector<16x32xbf16>
    %cst_75 = arith.constant dense<0.000000e+00> : vector<16x32xf32>
    %151 = tpu.matmul %150, %149, %cst_75 {dimension_numbers = #tpu.dot_dimension_numbers<[1], [0], [0], [1], [0, 0, 1, 1], [], []>} : vector<16x32xbf16>, vector<32x32xbf16>, vector<16x32xf32> -> vector<16x32xf32>
    %c10 = arith.constant 10 : index
    %c0_76 = arith.constant 0 : index
    %152 = vector.load %arg3[%c10, %c0_76] : memref<12x32xf32, #tpu.memory_space<vmem>>, vector<1x32xf32>
    %153 = vector.broadcast %152 : vector<1x32xf32> to vector<16x32xf32>
    %154 = arith.addf %151, %153 : vector<16x32xf32>
    %cst_77 = arith.constant 0.000000e+00 : f32
    %155 = vector.broadcast %cst_77 : f32 to vector<16x32xf32>
    %156 = arith.cmpf ogt, %154, %155 : vector<16x32xf32>
    %cst_78 = arith.constant 0.00999999977 : f32
    %157 = vector.broadcast %cst_78 : f32 to vector<16x32xf32>
    %158 = arith.mulf %157, %154 : vector<16x32xf32>
    %159 = arith.select %156, %154, %158 : vector<16x32xi1>, vector<16x32xf32>
    %c448 = arith.constant 448 : index
    %c0_79 = arith.constant 0 : index
    %160 = vector.load %arg2[%c448, %c0_79] : memref<480x32xbf16, #tpu.memory_space<vmem>>, vector<32x32xbf16>
    %161 = arith.truncf %159 : vector<16x32xf32> to vector<16x32xbf16>
    %cst_80 = arith.constant dense<0.000000e+00> : vector<16x32xf32>
    %162 = tpu.matmul %161, %160, %cst_80 {dimension_numbers = #tpu.dot_dimension_numbers<[1], [0], [0], [1], [0, 0, 1, 1], [], []>} : vector<16x32xbf16>, vector<32x32xbf16>, vector<16x32xf32> -> vector<16x32xf32>
    %c11 = arith.constant 11 : index
    %c0_81 = arith.constant 0 : index
    %163 = vector.load %arg3[%c11, %c0_81] : memref<12x32xf32, #tpu.memory_space<vmem>>, vector<1x32xf32>
    %164 = vector.broadcast %163 : vector<1x32xf32> to vector<16x32xf32>
    %165 = arith.addf %162, %164 : vector<16x32xf32>
    %166 = arith.mulf %165, %165 : vector<16x32xf32>
    %cst_82 = arith.constant dense<0.000000e+00> : vector<16xf32>
    %167 = vector.multi_reduction <add>, %166, %cst_82 [1] : vector<16x32xf32> to vector<16xf32>
    %168 = vector.shape_cast %167 : vector<16xf32> to vector<16x1xf32>
    %cst_83 = arith.constant 1.000000e-24 : f32
    %169 = vector.broadcast %cst_83 : f32 to vector<16x1xf32>
    %170 = arith.maximumf %168, %169 : vector<16x1xf32>
    %171 = math.rsqrt %170 : vector<16x1xf32>
    %172 = vector.broadcast %171 : vector<16x1xf32> to vector<16x32xf32>
    %173 = arith.mulf %165, %172 : vector<16x32xf32>
    %cst_84 = arith.constant 0.000000e+00 : f32
    %174 = vector.broadcast %cst_84 : f32 to vector<16x64xf32>
    %175 = tpu.concatenate %148, %173, %174 in 1 : vector<16x32xf32>, vector<16x32xf32>, vector<16x64xf32> -> vector<16x128xf32>
    %c0_85 = arith.constant 0 : index
    %c0_86 = arith.constant 0 : index
    %176 = vector.load %arg4[%c0_85, %c0_86] : memref<16x128xf32, #tpu.memory_space<vmem>>, vector<16x128xf32>
    tpu.vector_store %arg4[%c0_85, %c0_86], %175 {strides = array<i32>} : memref<16x128xf32, #tpu.memory_space<vmem>>, vector<16x128xf32>,
    return
  }
}

</mosaic_0001>

<llo_original>
// kernel: tpu_custom_call.1
$region0: #{tpu_custom_call.1}
  #allocation0 [shape = 'u32[]', space=smem, size = 0x4, offset = 0x4, fixed_abs, tag = 'smem constant byte address 0x4 - core index']
  #allocation1 [shape = 'u32[144,128]{1,0:T(1,128)}', space=vmem, size = 0x12000, scoped, tag = 'internal scratch']
  %s0 = inlined_call_operand.vmem [shape: f32[2,16,16], index: 0, kind: input, shape index: {}]
  %s1 = inlined_call_operand.vmem [shape: bf16[2,16,16], index: 1, kind: input, shape index: {}]
  %s2 = inlined_call_operand.vmem [shape: bf16[480,32], index: 2, kind: input, shape index: {}]
  %s3 = inlined_call_operand.vmem [shape: f32[12,32], index: 3, kind: input, shape index: {}]
  %s4 = inlined_call_operand.hbm [shape: f32[16,128], index: 4, kind: output, shape index: {}]
  %s5 = sld [smem:[#allocation0]]
  $region26: #{tpu_custom_call.1} parent=0
    _
  %s7 = ssub.s32 1, %s5
  %s8 = scalar_select 0, %s7, %s5
  $region1: #{tpu_custom_call.1} parent=0
    #allocation2 [shape = 'u8[8192]{0}', space=vmem, size = 0x2000, scoped, tag = 'output window, operand 0, single buffered']
    #allocation3 [shape = 's32[1]{0}', space=sflag, size = 0x4, scoped, tag = 'scoped memory for tpu_custom_call.1']
    %9 = vsyncpa [#allocation3], 0
    // Predicated region
    $region2: #{tpu_custom_call.1} parent=1 // pred_check
      _
    $region3: #{tpu_custom_call.1} parent=1 // pred_check_branch
      %11 = sbr.rel (0) target = $region5
    $region4: #{tpu_custom_call.1} parent=1 // pred_region
      _
    $region5: #{tpu_custom_call.1} parent=1 // pred_fallthru
      _
    // Predicated region
    $region6: #{tpu_custom_call.1} parent=1 // pred_check
      _
    $region7: #{tpu_custom_call.1} parent=1 // pred_check_branch
      %13 = sbr.rel (0) target = $region9
    $region8: #{tpu_custom_call.1} parent=1 // pred_region
      _
    $region9: #{tpu_custom_call.1} parent=1 // pred_fallthru
      _
    // Predicated region
    $region10: #{tpu_custom_call.1} parent=1 // pred_check
      _
    $region11: #{tpu_custom_call.1} parent=1 // pred_check_branch
      %15 = sbr.rel (0) target = $region13
    $region12: #{tpu_custom_call.1} parent=1 // pred_region
      _
    $region13: #{tpu_custom_call.1} parent=1 // pred_fallthru
      _
    // Predicated region
    $region14: #{tpu_custom_call.1} parent=1 // pred_check
      _
    $region15: #{tpu_custom_call.1} parent=1 // pred_check_branch
      %17 = sbr.rel (0) target = $region17
    $region16: #{tpu_custom_call.1} parent=1 // pred_region
      _
    $region17: #{tpu_custom_call.1} parent=1 // pred_fallthru
      _
    %v19 = vld [vmem:[%s0] sm:$0xff]
    %v20 = vld [vmem:[%s0 + $0x8] sm:$0xff]
    %s21 = scalar_lea.vmem %s0, 16
    %v22 = vld [vmem:[%s21] sm:$0xff]
    %v23 = vld [vmem:[%s21 + $0x8] sm:$0xff]
    %v24 = vld [vmem:[%s1] sm:$0xf]
    %v25 = vld [vmem:[%s1 + $0x4] sm:$0xf]
    %s26 = scalar_lea.vmem %s1, 8
    %v27 = vld [vmem:[%s26] sm:$0xf]
    %v28 = vld [vmem:[%s26 + $0x4] sm:$0xf]
    %v29 = vld [vmem:[%s2] sm:$0xf]
    %v30 = vld [vmem:[%s2 + $0x4] sm:$0xf]
    %v31 = vpack.c.bf16 %v20, %v19
    %v32 = vld [vmem:[%s3] sm:$0x1]
    %v33 = vlaneseq
    %v34 = vshrl.u32 %v33, 7
    %v35 = vsub.s32 0, %v34
    %v36 = vrot.slane %v32, %v35
    %v39 = vunpack.c.l.b16 %v29
    %v40 = vunpack.c.l.b16 %v30
    %v41 = vpack.c.b16 %v40, %v39
    %vm43 = vcmask 130048
    %v45 = vsel %vm43, %v31, 0
    %47 = vmatprep.subr.bf16.mxu0 0
    %48 = vmatpush1.bf16.msra.mxu0 %v41
    %49 = vmatprep.subr.bf16.mxu0 0
    %50 = vmatpush1.bf16.msra.mxu0 0
    %51 = vmatprep.subr.bf16.mxu0 0
    %52 = vmatpush1.bf16.msra.mxu0 0
    %53 = vmatprep.subr.bf16.mxu0 0
    %54 = vmatpush1.bf16.msra.mxu0 0
    %55 = vmatprep.subr.bf16.mxu0 0
    %56 = vmatpush1.bf16.msra.mxu0 0
    %57 = vmatprep.subr.bf16.mxu0 0
    %58 = vmatpush1.bf16.msra.mxu0 0
    %59 = vmatprep.subr.bf16.mxu0 0
    %60 = vmatpush1.bf16.msra.mxu0 0
    %61 = vmatprep.subr.bf16.mxu0 0
    %62 = vmatpush1.bf16.msra.mxu0 0
    %63 = vmatprep.subr.bf16.mxu0 0
    %64 = vmatpush1.bf16.msra.mxu0 0
    %65 = vmatprep.subr.bf16.mxu0 0
    %66 = vmatpush1.bf16.msra.mxu0 0
    %67 = vmatprep.subr.bf16.mxu0 0
    %68 = vmatpush1.bf16.msra.mxu0 0
    %69 = vmatprep.subr.bf16.mxu0 0
    %70 = vmatpush1.bf16.msra.mxu0 0
    %71 = vmatprep.subr.bf16.mxu0 0
    %72 = vmatpush1.bf16.msra.mxu0 0
    %73 = vmatprep.subr.bf16.mxu0 0
    %74 = vmatpush1.bf16.msra.mxu0 0
    %75 = vmatprep.subr.bf16.mxu0 0
    %76 = vmatpush1.bf16.msra.mxu0 0
    %77 = vmatprep.subr.bf16.mxu0 0
    %78 = vmatpush1.bf16.msra.mxu0 0
    %79 = vmatprep.mubr.bf16.mxu0 0
    %80 = vmatmul.mubr.bf16.gmra.mrb[0].mxu0 %v45
    %v81 = vpop.f32.mrb[0].mxu0
    %v82 = vadd.f32 %v36, %v81
    %v83 = vpop.f32.mrb[0].mxu0
    %v84 = vpop.f32.mrb[0].mxu0
    %v85 = vadd.f32 %v36, %v84
    %v86 = vpop.f32.mrb[0].mxu0
    %87 = vdwg.mxu0
    %vm88 = vcmp.gt.f32.partialorder %v82, 0.0
    %vm89 = vcmp.gt.f32.partialorder %v85, 0.0
    %v90 = vmul.f32 %v82, 0.01
    %v91 = vmul.f32 %v85, 0.01
    %v92 = vsel %vm88, %v82, %v90
    %v93 = vsel %vm89, %v85, %v91
    %v94 = vld [vmem:[%s2 + $0x8] sm:$0xf]
    %v95 = vld [vmem:[%s2 + $0xc] sm:$0xf]
    %v96 = vld [vmem:[%s2 + $0x10] sm:$0xf]
    %v97 = vld [vmem:[%s2 + $0x14] sm:$0xf]
    %v98 = vpack.c.bf16 %v93, %v92
    %v99 = vld [vmem:[%s3 + $0x1] sm:$0x1]
    %v100 = vlaneseq
    %v101 = vshrl.u32 %v100, 7
    %v102 = vsub.s32 0, %v101
    %v103 = vrot.slane %v99, %v102
    %v108 = vunpack.c.l.b16 %v94
    %v109 = vunpack.c.l.b16 %v95
    %v110 = vunpack.c.l.b16 %v96
    %v111 = vunpack.c.l.b16 %v97
    %v112 = vpack.c.b16 %v109, %v108
    %v113 = vpack.c.b16 %v111, %v110
    %vm116 = vcmask 261120
    %v118 = vsel %vm116, %v98, 0
    %120 = vmatprep.subr.bf16.mxu0 0
    %121 = vmatpush1.bf16.msra.mxu0 %v112
    %122 = vmatprep.subr.bf16.mxu0 0
    %123 = vmatpush1.bf16.msra.mxu0 %v113
    %124 = vmatprep.subr.bf16.mxu0 0
    %125 = vmatpush1.bf16.msra.mxu0 0
    %126 = vmatprep.subr.bf16.mxu0 0
    %127 = vmatpush1.bf16.msra.mxu0 0
    %128 = vmatprep.subr.bf16.mxu0 0
    %129 = vmatpush1.bf16.msra.mxu0 0
    %130 = vmatprep.subr.bf16.mxu0 0
    %131 = vmatpush1.bf16.msra.mxu0 0
    %132 = vmatprep.subr.bf16.mxu0 0
    %133 = vmatpush1.bf16.msra.mxu0 0
    %134 = vmatprep.subr.bf16.mxu0 0
    %135 = vmatpush1.bf16.msra.mxu0 0
    %136 = vmatprep.subr.bf16.mxu0 0
    %137 = vmatpush1.bf16.msra.mxu0 0
    %138 = vmatprep.subr.bf16.mxu0 0
    %139 = vmatpush1.bf16.msra.mxu0 0
    %140 = vmatprep.subr.bf16.mxu0 0
    %141 = vmatpush1.bf16.msra.mxu0 0
    %142 = vmatprep.subr.bf16.mxu0 0
    %143 = vmatpush1.bf16.msra.mxu0 0
    %144 = vmatprep.subr.bf16.mxu0 0
    %145 = vmatpush1.bf16.msra.mxu0 0
    %146 = vmatprep.subr.bf16.mxu0 0
    %147 = vmatpush1.bf16.msra.mxu0 0
    %148 = vmatprep.subr.bf16.mxu0 0
    %149 = vmatpush1.bf16.msra.mxu0 0
    %150 = vmatprep.subr.bf16.mxu0 0
    %151 = vmatpush1.bf16.msra.mxu0 0
    %152 = vmatprep.mubr.bf16.mxu0 0
    %153 = vmatmul.mubr.bf16.gmra.mrb[0].mxu0 %v118
    %v154 = vpop.f32.mrb[0].mxu0
    %v155 = vadd.f32 %v103, %v154
    %v156 = vpop.f32.mrb[0].mxu0
    %v157 = vpop.f32.mrb[0].mxu0
    %v158 = vadd.f32 %v103, %v157
    %v159 = vpop.f32.mrb[0].mxu0
    %160 = vdwg.mxu0
    %vm161 = vcmp.gt.f32.partialorder %v155, 0.0
    %vm162 = vcmp.gt.f32.partialorder %v158, 0.0
    %v163 = vmul.f32 %v155, 0.01
    %v164 = vmul.f32 %v158, 0.01
    %v165 = vsel %vm161, %v155, %v163
    %v166 = vsel %vm162, %v158, %v164
    %v167 = vld [vmem:[%s2 + $0x18] sm:$0xf]
    %v168 = vld [vmem:[%s2 + $0x1c] sm:$0xf]
    %v169 = vpack.c.bf16 %v23, %v22
    %v170 = vld [vmem:[%s3 + $0x2] sm:$0x1]
    %v171 = vlaneseq
    %v172 = vshrl.u32 %v171, 7
    %v173 = vsub.s32 0, %v172
    %v174 = vrot.slane %v170, %v173
    %v177 = vunpack.c.l.b16 %v167
    %v178 = vunpack.c.l.b16 %v168
    %v179 = vpack.c.b16 %v178, %v177
    %v182 = vsel %vm43, %v169, 0
    %184 = vmatprep.subr.bf16.mxu0 0
    %185 = vmatpush1.bf16.msra.mxu0 %v179
    %186 = vmatprep.subr.bf16.mxu0 0
    %187 = vmatpush1.bf16.msra.mxu0 0
    %188 = vmatprep.subr.bf16.mxu0 0
    %189 = vmatpush1.bf16.msra.mxu0 0
    %190 = vmatprep.subr.bf16.mxu0 0
    %191 = vmatpush1.bf16.msra.mxu0 0
    %192 = vmatprep.subr.bf16.mxu0 0
    %193 = vmatpush1.bf16.msra.mxu0 0
    %194 = vmatprep.subr.bf16.mxu0 0
    %195 = vmatpush1.bf16.msra.mxu0 0
    %196 = vmatprep.subr.bf16.mxu0 0
    %197 = vmatpush1.bf16.msra.mxu0 0
    %198 = vmatprep.subr.bf16.mxu0 0
    %199 = vmatpush1.bf16.msra.mxu0 0
    %200 = vmatprep.subr.bf16.mxu0 0
    %201 = vmatpush1.bf16.msra.mxu0 0
    %202 = vmatprep.subr.bf16.mxu0 0
    %203 = vmatpush1.bf16.msra.mxu0 0
    %204 = vmatprep.subr.bf16.mxu0 0
    %205 = vmatpush1.bf16.msra.mxu0 0
    %206 = vmatprep.subr.bf16.mxu0 0
    %207 = vmatpush1.bf16.msra.mxu0 0
    %208 = vmatprep.subr.bf16.mxu0 0
    %209 = vmatpush1.bf16.msra.mxu0 0
    %210 = vmatprep.subr.bf16.mxu0 0
    %211 = vmatpush1.bf16.msra.mxu0 0
    %212 = vmatprep.subr.bf16.mxu0 0
    %213 = vmatpush1.bf16.msra.mxu0 0
    %214 = vmatprep.subr.bf16.mxu0 0
    %215 = vmatpush1.bf16.msra.mxu0 0
    %216 = vmatprep.mubr.bf16.mxu0 0
    %217 = vmatmul.mubr.bf16.gmra.mrb[0].mxu0 %v182
    %v218 = vpop.f32.mrb[0].mxu0
    %v219 = vadd.f32 %v174, %v218
    %v220 = vpop.f32.mrb[0].mxu0
    %v221 = vpop.f32.mrb[0].mxu0
    %v222 = vadd.f32 %v174, %v221
    %v223 = vpop.f32.mrb[0].mxu0
    %224 = vdwg.mxu0
    %vm225 = vcmp.gt.f32.partialorder %v219, 0.0
    %vm226 = vcmp.gt.f32.partialorder %v222, 0.0
    %v227 = vmul.f32 %v219, 0.01
    %v228 = vmul.f32 %v222, 0.01
    %v229 = vsel %vm225, %v219, %v227
    %v230 = vsel %vm226, %v222, %v228
    %v231 = vld [vmem:[%s2 + $0x20] sm:$0xf]
    %v232 = vld [vmem:[%s2 + $0x24] sm:$0xf]
    %v233 = vld [vmem:[%s2 + $0x28] sm:$0xf]
    %v234 = vld [vmem:[%s2 + $0x2c] sm:$0xf]
    %v235 = vpack.c.bf16 %v230, %v229
    %v236 = vld [vmem:[%s3 + $0x3] sm:$0x1]
    %v237 = vlaneseq
    %v238 = vshrl.u32 %v237, 7
    %v239 = vsub.s32 0, %v238
    %v240 = vrot.slane %v236, %v239
    %v245 = vunpack.c.l.b16 %v231
    %v246 = vunpack.c.l.b16 %v232
    %v247 = vunpack.c.l.b16 %v233
    %v248 = vunpack.c.l.b16 %v234
    %v249 = vpack.c.b16 %v246, %v245
    %v250 = vpack.c.b16 %v248, %v247
    %v254 = vsel %vm116, %v235, 0
    %256 = vmatprep.subr.bf16.mxu0 0
    %257 = vmatpush1.bf16.msra.mxu0 %v249
    %258 = vmatprep.subr.bf16.mxu0 0
    %259 = vmatpush1.bf16.msra.mxu0 %v250
    %260 = vmatprep.subr.bf16.mxu0 0
    %261 = vmatpush1.bf16.msra.mxu0 0
    %262 = vmatprep.subr.bf16.mxu0 0
    %263 = vmatpush1.bf16.msra.mxu0 0
    %264 = vmatprep.subr.bf16.mxu0 0
    %265 = vmatpush1.bf16.msra.mxu0 0
    %266 = vmatprep.subr.bf16.mxu0 0
    %267 = vmatpush1.bf16.msra.mxu0 0
    %268 = vmatprep.subr.bf16.mxu0 0
    %269 = vmatpush1.bf16.msra.mxu0 0
    %270 = vmatprep.subr.bf16.mxu0 0
    %271 = vmatpush1.bf16.msra.mxu0 0
    %272 = vmatprep.subr.bf16.mxu0 0
    %273 = vmatpush1.bf16.msra.mxu0 0
    %274 = vmatprep.subr.bf16.mxu0 0
    %275 = vmatpush1.bf16.msra.mxu0 0
    %276 = vmatprep.subr.bf16.mxu0 0
    %277 = vmatpush1.bf16.msra.mxu0 0
    %278 = vmatprep.subr.bf16.mxu0 0
    %279 = vmatpush1.bf16.msra.mxu0 0
    %280 = vmatprep.subr.bf16.mxu0 0
    %281 = vmatpush1.bf16.msra.mxu0 0
    %282 = vmatprep.subr.bf16.mxu0 0
    %283 = vmatpush1.bf16.msra.mxu0 0
    %284 = vmatprep.subr.bf16.mxu0 0
    %285 = vmatpush1.bf16.msra.mxu0 0
    %286 = vmatprep.subr.bf16.mxu0 0
    %287 = vmatpush1.bf16.msra.mxu0 0
    %288 = vmatprep.mubr.bf16.mxu0 0
    %289 = vmatmul.mubr.bf16.gmra.mrb[0].mxu0 %v254
    %v290 = vpop.f32.mrb[0].mxu0
    %v291 = vadd.f32 %v240, %v290
    %v292 = vpop.f32.mrb[0].mxu0
    %v293 = vpop.f32.mrb[0].mxu0
    %v294 = vadd.f32 %v240, %v293
    %v295 = vpop.f32.mrb[0].mxu0
    %296 = vdwg.mxu0
    %vm297 = vcmp.gt.f32.partialorder %v291, 0.0
    %vm298 = vcmp.gt.f32.partialorder %v294, 0.0
    %v299 = vmul.f32 %v291, 0.01
    %v300 = vmul.f32 %v294, 0.01
    %v301 = vsel %vm297, %v291, %v299
    %v302 = vsel %vm298, %v294, %v300
    %v303 = vpack.c.bf16 %v302, %v301
    %v306 = vunpack.c.l.b16 %v24
    %v307 = vunpack.c.l.b16 %v25
    %v308 = vpack.c.b16 %v307, %v306
    %v310 = vsel %vm43, %v308, 0
    %312 = vmatprep.subr.bf16.mxu0 0
    %313 = vmatpush1.bf16.msra.mxu0 %v303
    %314 = vmatprep.subr.bf16.mxu0 0
    %315 = vmatpush1.bf16.msra.mxu0 0
    %316 = vmatprep.subr.bf16.mxu0 0
    %317 = vmatpush1.bf16.msra.mxu0 0
    %318 = vmatprep.subr.bf16.mxu0 0
    %319 = vmatpush1.bf16.msra.mxu0 0
    %320 = vmatprep.subr.bf16.mxu0 0
    %321 = vmatpush1.bf16.msra.mxu0 0
    %322 = vmatprep.subr.bf16.mxu0 0
    %323 = vmatpush1.bf16.msra.mxu0 0
    %324 = vmatprep.subr.bf16.mxu0 0
    %325 = vmatpush1.bf16.msra.mxu0 0
    %326 = vmatprep.subr.bf16.mxu0 0
    %327 = vmatpush1.bf16.msra.mxu0 0
    %328 = vmatprep.subr.bf16.mxu0 0
    %329 = vmatpush1.bf16.msra.mxu0 0
    %330 = vmatprep.subr.bf16.mxu0 0
    %331 = vmatpush1.bf16.msra.mxu0 0
    %332 = vmatprep.subr.bf16.mxu0 0
    %333 = vmatpush1.bf16.msra.mxu0 0
    %334 = vmatprep.subr.bf16.mxu0 0
    %335 = vmatpush1.bf16.msra.mxu0 0
    %336 = vmatprep.subr.bf16.mxu0 0
    %337 = vmatpush1.bf16.msra.mxu0 0
    %338 = vmatprep.subr.bf16.mxu0 0
    %339 = vmatpush1.bf16.msra.mxu0 0
    %340 = vmatprep.subr.bf16.mxu0 0
    %341 = vmatpush1.bf16.msra.mxu0 0
    %342 = vmatprep.subr.bf16.mxu0 0
    %343 = vmatpush1.bf16.msra.mxu0 0
    %344 = vmatprep.mubr.bf16.mxu0 0
    %345 = vmatmul.mubr.bf16.gmra.mrb[0].mxu0 %v310
    %v346 = vpop.f32.mrb[0].mxu0
    %v347 = vadd.f32 0.0, %v346
    %v348 = vpop.f32.mrb[0].mxu0
    %v349 = vpop.f32.mrb[0].mxu0
    %v350 = vadd.f32 0.0, %v349
    %v351 = vpop.f32.mrb[0].mxu0
    %352 = vdwg.mxu0
    %v353 = vld [vmem:[%s2 + $0x30] sm:$0xf]
    %v354 = vld [vmem:[%s2 + $0x34] sm:$0xf]
    %v355 = vld [vmem:[%s2 + $0x38] sm:$0xf]
    %v356 = vld [vmem:[%s2 + $0x3c] sm:$0xf]
    %v357 = vpack.c.bf16 %v350, %v347
    %v358 = vld [vmem:[%s2 + $0x40] sm:$0xf]
    %v359 = vld [vmem:[%s2 + $0x44] sm:$0xf]
    %v360 = vld [vmem:[%s2 + $0x48] sm:$0xf]
    %v361 = vld [vmem:[%s2 + $0x4c] sm:$0xf]
    %v362 = vpack.c.bf16 %v166, %v165
    %v367 = vunpack.c.l.b16 %v358
    %v368 = vunpack.c.l.b16 %v359
    %v369 = vunpack.c.l.b16 %v360
    %v370 = vunpack.c.l.b16 %v361
    %v371 = vpack.c.b16 %v368, %v367
    %v372 = vpack.c.b16 %v370, %v369
    %v376 = vsel %vm116, %v362, 0
    %378 = vmatprep.subr.bf16.mxu0 0
    %379 = vmatpush1.bf16.msra.mxu0 %v371
    %380 = vmatprep.subr.bf16.mxu0 0
    %381 = vmatpush1.bf16.msra.mxu0 %v372
    %382 = vmatprep.subr.bf16.mxu0 0
    %383 = vmatpush1.bf16.msra.mxu0 0
    %384 = vmatprep.subr.bf16.mxu0 0
    %385 = vmatpush1.bf16.msra.mxu0 0
    %386 = vmatprep.subr.bf16.mxu0 0
    %387 = vmatpush1.bf16.msra.mxu0 0
    %388 = vmatprep.subr.bf16.mxu0 0
    %389 = vmatpush1.bf16.msra.mxu0 0
    %390 = vmatprep.subr.bf16.mxu0 0
    %391 = vmatpush1.bf16.msra.mxu0 0
    %392 = vmatprep.subr.bf16.mxu0 0
    %393 = vmatpush1.bf16.msra.mxu0 0
    %394 = vmatprep.subr.bf16.mxu0 0
    %395 = vmatpush1.bf16.msra.mxu0 0
    %396 = vmatprep.subr.bf16.mxu0 0
    %397 = vmatpush1.bf16.msra.mxu0 0
    %398 = vmatprep.subr.bf16.mxu0 0
    %399 = vmatpush1.bf16.msra.mxu0 0
    %400 = vmatprep.subr.bf16.mxu0 0
    %401 = vmatpush1.bf16.msra.mxu0 0
    %402 = vmatprep.subr.bf16.mxu0 0
    %403 = vmatpush1.bf16.msra.mxu0 0
    %404 = vmatprep.subr.bf16.mxu0 0
    %405 = vmatpush1.bf16.msra.mxu0 0
    %406 = vmatprep.subr.bf16.mxu0 0
    %407 = vmatpush1.bf16.msra.mxu0 0
    %408 = vmatprep.subr.bf16.mxu0 0
    %409 = vmatpush1.bf16.msra.mxu0 0
    %410 = vmatprep.mubr.bf16.mxu0 0
    %411 = vmatmul.mubr.bf16.gmra.mrb[0].mxu0 %v376
    %v412 = vpop.f32.mrb[0].mxu0
    %v413 = vadd.f32 0.0, %v412
    %v414 = vpop.f32.mrb[0].mxu0
    %v415 = vpop.f32.mrb[0].mxu0
    %v416 = vadd.f32 0.0, %v415
    %v417 = vpop.f32.mrb[0].mxu0
    %418 = vdwg.mxu0
    %v423 = vunpack.c.l.b16 %v353
    %v424 = vunpack.c.l.b16 %v354
    %v425 = vunpack.c.l.b16 %v355
    %v426 = vunpack.c.l.b16 %v356
    %v427 = vpack.c.b16 %v424, %v423
    %v428 = vpack.c.b16 %v426, %v425
    %v432 = vsel %vm116, %v357, 0
    %434 = vmatprep.subr.bf16.mxu0 0
    %435 = vmatpush1.bf16.msra.mxu0 %v427
    %436 = vmatprep.subr.bf16.mxu0 0
    %437 = vmatpush1.bf16.msra.mxu0 %v428
    %438 = vmatprep.subr.bf16.mxu0 0
    %439 = vmatpush1.bf16.msra.mxu0 0
    %440 = vmatprep.subr.bf16.mxu0 0
    %441 = vmatpush1.bf16.msra.mxu0 0
    %442 = vmatprep.subr.bf16.mxu0 0
    %443 = vmatpush1.bf16.msra.mxu0 0
    %444 = vmatprep.subr.bf16.mxu0 0
    %445 = vmatpush1.bf16.msra.mxu0 0
    %446 = vmatprep.subr.bf16.mxu0 0
    %447 = vmatpush1.bf16.msra.mxu0 0
    %448 = vmatprep.subr.bf16.mxu0 0
    %449 = vmatpush1.bf16.msra.mxu0 0
    %450 = vmatprep.subr.bf16.mxu0 0
    %451 = vmatpush1.bf16.msra.mxu0 0
    %452 = vmatprep.subr.bf16.mxu0 0
    %453 = vmatpush1.bf16.msra.mxu0 0
    %454 = vmatprep.subr.bf16.mxu0 0
    %455 = vmatpush1.bf16.msra.mxu0 0
    %456 = vmatprep.subr.bf16.mxu0 0
    %457 = vmatpush1.bf16.msra.mxu0 0
    %458 = vmatprep.subr.bf16.mxu0 0
    %459 = vmatpush1.bf16.msra.mxu0 0
    %460 = vmatprep.subr.bf16.mxu0 0
    %461 = vmatpush1.bf16.msra.mxu0 0
    %462 = vmatprep.subr.bf16.mxu0 0
    %463 = vmatpush1.bf16.msra.mxu0 0
    %464 = vmatprep.subr.bf16.mxu0 0
    %465 = vmatpush1.bf16.msra.mxu0 0
    %466 = vmatprep.mubr.bf16.mxu0 0
    %467 = vmatmul.mubr.bf16.gmra.mrb[0].mxu0 %v432
    %v468 = vpop.f32.mrb[0].mxu0
    %v469 = vadd.f32 %v413, %v468
    %v470 = vpop.f32.mrb[0].mxu0
    %v471 = vpop.f32.mrb[0].mxu0
    %v472 = vadd.f32 %v416, %v471
    %v473 = vpop.f32.mrb[0].mxu0
    %474 = vdwg.mxu0
    %v475 = vld [vmem:[%s3 + $0x4] sm:$0x1]
    %v476 = vlaneseq
    %v477 = vshrl.u32 %v476, 7
    %v478 = vsub.s32 0, %v477
    %v479 = vrot.slane %v475, %v478
    %v480 = vadd.f32 %v469, %v479
    %v481 = vadd.f32 %v472, %v479
    %vm482 = vcmp.gt.f32.partialorder %v480, 0.0
    %vm483 = vcmp.gt.f32.partialorder %v481, 0.0
    %v484 = vmul.f32 %v480, 0.01
    %v485 = vmul.f32 %v481, 0.01
    %v486 = vsel %vm482, %v480, %v484
    %v487 = vsel %vm483, %v481, %v485
    %v488 = vadd.f32 %v486, %v165
    %v489 = vadd.f32 %v487, %v166
    %v492 = vunpack.c.l.b16 %v27
    %v493 = vunpack.c.l.b16 %v28
    %v494 = vpack.c.b16 %v493, %v492
    %v496 = vsel %vm43, %v494, 0
    %498 = vmatprep.subr.bf16.mxu0 0
    %499 = vmatpush1.bf16.msra.mxu0 %v362
    %500 = vmatprep.subr.bf16.mxu0 0
    %501 = vmatpush1.bf16.msra.mxu0 0
    %502 = vmatprep.subr.bf16.mxu0 0
    %503 = vmatpush1.bf16.msra.mxu0 0
    %504 = vmatprep.subr.bf16.mxu0 0
    %505 = vmatpush1.bf16.msra.mxu0 0
    %506 = vmatprep.subr.bf16.mxu0 0
    %507 = vmatpush1.bf16.msra.mxu0 0
    %508 = vmatprep.subr.bf16.mxu0 0
    %509 = vmatpush1.bf16.msra.mxu0 0
    %510 = vmatprep.subr.bf16.mxu0 0
    %511 = vmatpush1.bf16.msra.mxu0 0
    %512 = vmatprep.subr.bf16.mxu0 0
    %513 = vmatpush1.bf16.msra.mxu0 0
    %514 = vmatprep.subr.bf16.mxu0 0
    %515 = vmatpush1.bf16.msra.mxu0 0
    %516 = vmatprep.subr.bf16.mxu0 0
    %517 = vmatpush1.bf16.msra.mxu0 0
    %518 = vmatprep.subr.bf16.mxu0 0
    %519 = vmatpush1.bf16.msra.mxu0 0
    %520 = vmatprep.subr.bf16.mxu0 0
    %521 = vmatpush1.bf16.msra.mxu0 0
    %522 = vmatprep.subr.bf16.mxu0 0
    %523 = vmatpush1.bf16.msra.mxu0 0
    %524 = vmatprep.subr.bf16.mxu0 0
    %525 = vmatpush1.bf16.msra.mxu0 0
    %526 = vmatprep.subr.bf16.mxu0 0
    %527 = vmatpush1.bf16.msra.mxu0 0
    %528 = vmatprep.subr.bf16.mxu0 0
    %529 = vmatpush1.bf16.msra.mxu0 0
    %530 = vmatprep.mubr.bf16.mxu0 0
    %531 = vmatmul.mubr.bf16.gmra.mrb[0].mxu0 %v496
    %v532 = vpop.f32.mrb[0].mxu0
    %v533 = vadd.f32 0.0, %v532
    %v534 = vpop.f32.mrb[0].mxu0
    %v535 = vpop.f32.mrb[0].mxu0
    %v536 = vadd.f32 0.0, %v535
    %v537 = vpop.f32.mrb[0].mxu0
    %538 = vdwg.mxu0
    %v539 = vld [vmem:[%s2 + $0x50] sm:$0xf]
    %v540 = vld [vmem:[%s2 + $0x54] sm:$0xf]
    %v541 = vld [vmem:[%s2 + $0x58] sm:$0xf]
    %v542 = vld [vmem:[%s2 + $0x5c] sm:$0xf]
    %v543 = vpack.c.bf16 %v536, %v533
    %v544 = vld [vmem:[%s2 + $0x60] sm:$0xf]
    %v545 = vld [vmem:[%s2 + $0x64] sm:$0xf]
    %v546 = vld [vmem:[%s2 + $0x68] sm:$0xf]
    %v547 = vld [vmem:[%s2 + $0x6c] sm:$0xf]
    %v552 = vunpack.c.l.b16 %v544
    %v553 = vunpack.c.l.b16 %v545
    %v554 = vunpack.c.l.b16 %v546
    %v555 = vunpack.c.l.b16 %v547
    %v556 = vpack.c.b16 %v553, %v552
    %v557 = vpack.c.b16 %v555, %v554
    %v561 = vsel %vm116, %v303, 0
    %563 = vmatprep.subr.bf16.mxu0 0
    %564 = vmatpush1.bf16.msra.mxu0 %v556
    %565 = vmatprep.subr.bf16.mxu0 0
    %566 = vmatpush1.bf16.msra.mxu0 %v557
    %567 = vmatprep.subr.bf16.mxu0 0
    %568 = vmatpush1.bf16.msra.mxu0 0
    %569 = vmatprep.subr.bf16.mxu0 0
    %570 = vmatpush1.bf16.msra.mxu0 0
    %571 = vmatprep.subr.bf16.mxu0 0
    %572 = vmatpush1.bf16.msra.mxu0 0
    %573 = vmatprep.subr.bf16.mxu0 0
    %574 = vmatpush1.bf16.msra.mxu0 0
    %575 = vmatprep.subr.bf16.mxu0 0
    %576 = vmatpush1.bf16.msra.mxu0 0
    %577 = vmatprep.subr.bf16.mxu0 0
    %578 = vmatpush1.bf16.msra.mxu0 0
    %579 = vmatprep.subr.bf16.mxu0 0
    %580 = vmatpush1.bf16.msra.mxu0 0
    %581 = vmatprep.subr.bf16.mxu0 0
    %582 = vmatpush1.bf16.msra.mxu0 0
    %583 = vmatprep.subr.bf16.mxu0 0
    %584 = vmatpush1.bf16.msra.mxu0 0
    %585 = vmatprep.subr.bf16.mxu0 0
    %586 = vmatpush1.bf16.msra.mxu0 0
    %587 = vmatprep.subr.bf16.mxu0 0
    %588 = vmatpush1.bf16.msra.mxu0 0
    %589 = vmatprep.subr.bf16.mxu0 0
    %590 = vmatpush1.bf16.msra.mxu0 0
    %591 = vmatprep.subr.bf16.mxu0 0
    %592 = vmatpush1.bf16.msra.mxu0 0
    %593 = vmatprep.subr.bf16.mxu0 0
    %594 = vmatpush1.bf16.msra.mxu0 0
    %595 = vmatprep.mubr.bf16.mxu0 0
    %596 = vmatmul.mubr.bf16.gmra.mrb[0].mxu0 %v561
    %v597 = vpop.f32.mrb[0].mxu0
    %v598 = vadd.f32 0.0, %v597
    %v599 = vpop.f32.mrb[0].mxu0
    %v600 = vpop.f32.mrb[0].mxu0
    %v601 = vadd.f32 0.0, %v600
    %v602 = vpop.f32.mrb[0].mxu0
    %603 = vdwg.mxu0
    %v608 = vunpack.c.l.b16 %v539
    %v609 = vunpack.c.l.b16 %v540
    %v610 = vunpack.c.l.b16 %v541
    %v611 = vunpack.c.l.b16 %v542
    %v612 = vpack.c.b16 %v609, %v608
    %v613 = vpack.c.b16 %v611, %v610
    %v617 = vsel %vm116, %v543, 0
    %619 = vmatprep.subr.bf16.mxu0 0
    %620 = vmatpush1.bf16.msra.mxu0 %v612
    %621 = vmatprep.subr.bf16.mxu0 0
    %622 = vmatpush1.bf16.msra.mxu0 %v613
    %623 = vmatprep.subr.bf16.mxu0 0
    %624 = vmatpush1.bf16.msra.mxu0 0
    %625 = vmatprep.subr.bf16.mxu0 0
    %626 = vmatpush1.bf16.msra.mxu0 0
    %627 = vmatprep.subr.bf16.mxu0 0
    %628 = vmatpush1.bf16.msra.mxu0 0
    %629 = vmatprep.subr.bf16.mxu0 0
    %630 = vmatpush1.bf16.msra.mxu0 0
    %631 = vmatprep.subr.bf16.mxu0 0
    %632 = vmatpush1.bf16.msra.mxu0 0
    %633 = vmatprep.subr.bf16.mxu0 0
    %634 = vmatpush1.bf16.msra.mxu0 0
    %635 = vmatprep.subr.bf16.mxu0 0
    %636 = vmatpush1.bf16.msra.mxu0 0
    %637 = vmatprep.subr.bf16.mxu0 0
    %638 = vmatpush1.bf16.msra.mxu0 0
    %639 = vmatprep.subr.bf16.mxu0 0
    %640 = vmatpush1.bf16.msra.mxu0 0
    %641 = vmatprep.subr.bf16.mxu0 0
    %642 = vmatpush1.bf16.msra.mxu0 0
    %643 = vmatprep.subr.bf16.mxu0 0
    %644 = vmatpush1.bf16.msra.mxu0 0
    %645 = vmatprep.subr.bf16.mxu0 0
    %646 = vmatpush1.bf16.msra.mxu0 0
    %647 = vmatprep.subr.bf16.mxu0 0
    %648 = vmatpush1.bf16.msra.mxu0 0
    %649 = vmatprep.subr.bf16.mxu0 0
    %650 = vmatpush1.bf16.msra.mxu0 0
    %651 = vmatprep.mubr.bf16.mxu0 0
    %652 = vmatmul.mubr.bf16.gmra.mrb[0].mxu0 %v617
    %v653 = vpop.f32.mrb[0].mxu0
    %v654 = vadd.f32 %v598, %v653
    %v655 = vpop.f32.mrb[0].mxu0
    %v656 = vpop.f32.mrb[0].mxu0
    %v657 = vadd.f32 %v601, %v656
    %v658 = vpop.f32.mrb[0].mxu0
    %659 = vdwg.mxu0
    %v660 = vld [vmem:[%s3 + $0x5] sm:$0x1]
    %v661 = vlaneseq
    %v662 = vshrl.u32 %v661, 7
    %v663 = vsub.s32 0, %v662
    %v664 = vrot.slane %v660, %v663
    %v665 = vadd.f32 %v654, %v664
    %v666 = vadd.f32 %v657, %v664
    %vm667 = vcmp.gt.f32.partialorder %v665, 0.0
    %vm668 = vcmp.gt.f32.partialorder %v666, 0.0
    %v669 = vmul.f32 %v665, 0.01
    %v670 = vmul.f32 %v666, 0.01
    %v671 = vsel %vm667, %v665, %v669
    %v672 = vsel %vm668, %v666, %v670
    %v673 = vadd.f32 %v671, %v301
    %v674 = vadd.f32 %v672, %v302
    %v675 = vpack.c.bf16 %v674, %v673
    %676 = vmatprep.subr.bf16.mxu0 0
    %677 = vmatpush1.bf16.msra.mxu0 %v675
    %678 = vmatprep.subr.bf16.mxu0 0
    %679 = vmatpush1.bf16.msra.mxu0 0
    %680 = vmatprep.subr.bf16.mxu0 0
    %681 = vmatpush1.bf16.msra.mxu0 0
    %682 = vmatprep.subr.bf16.mxu0 0
    %683 = vmatpush1.bf16.msra.mxu0 0
    %684 = vmatprep.subr.bf16.mxu0 0
    %685 = vmatpush1.bf16.msra.mxu0 0
    %686 = vmatprep.subr.bf16.mxu0 0
    %687 = vmatpush1.bf16.msra.mxu0 0
    %688 = vmatprep.subr.bf16.mxu0 0
    %689 = vmatpush1.bf16.msra.mxu0 0
    %690 = vmatprep.subr.bf16.mxu0 0
    %691 = vmatpush1.bf16.msra.mxu0 0
    %692 = vmatprep.subr.bf16.mxu0 0
    %693 = vmatpush1.bf16.msra.mxu0 0
    %694 = vmatprep.subr.bf16.mxu0 0
    %695 = vmatpush1.bf16.msra.mxu0 0
    %696 = vmatprep.subr.bf16.mxu0 0
    %697 = vmatpush1.bf16.msra.mxu0 0
    %698 = vmatprep.subr.bf16.mxu0 0
    %699 = vmatpush1.bf16.msra.mxu0 0
    %700 = vmatprep.subr.bf16.mxu0 0
    %701 = vmatpush1.bf16.msra.mxu0 0
    %702 = vmatprep.subr.bf16.mxu0 0
    %703 = vmatpush1.bf16.msra.mxu0 0
    %704 = vmatprep.subr.bf16.mxu0 0
    %705 = vmatpush1.bf16.msra.mxu0 0
    %706 = vmatprep.subr.bf16.mxu0 0
    %707 = vmatpush1.bf16.msra.mxu0 0
    %708 = vmatprep.mubr.bf16.mxu0 0
    %709 = vmatmul.mubr.bf16.gmra.mrb[0].mxu0 %v310
    %v710 = vpop.f32.mrb[0].mxu0
    %v711 = vadd.f32 0.0, %v710
    %v712 = vpop.f32.mrb[0].mxu0
    %v713 = vpop.f32.mrb[0].mxu0
    %v714 = vadd.f32 0.0, %v713
    %v715 = vpop.f32.mrb[0].mxu0
    %716 = vdwg.mxu0
    %v717 = vld [vmem:[%s2 + $0x70] sm:$0xf]
    %v718 = vld [vmem:[%s2 + $0x74] sm:$0xf]
    %v719 = vld [vmem:[%s2 + $0x78] sm:$0xf]
    %v720 = vld [vmem:[%s2 + $0x7c] sm:$0xf]
    %v721 = vpack.c.bf16 %v714, %v711
    %v722 = vld [vmem:[%s2 + $0x80] sm:$0xf]
    %v723 = vld [vmem:[%s2 + $0x84] sm:$0xf]
    %v724 = vld [vmem:[%s2 + $0x88] sm:$0xf]
    %v725 = vld [vmem:[%s2 + $0x8c] sm:$0xf]
    %v726 = vpack.c.bf16 %v489, %v488
    %v731 = vunpack.c.l.b16 %v722
    %v732 = vunpack.c.l.b16 %v723
    %v733 = vunpack.c.l.b16 %v724
    %v734 = vunpack.c.l.b16 %v725
    %v735 = vpack.c.b16 %v732, %v731
    %v736 = vpack.c.b16 %v734, %v733
    %v740 = vsel %vm116, %v726, 0
    %742 = vmatprep.subr.bf16.mxu0 0
    %743 = vmatpush1.bf16.msra.mxu0 %v735
    %744 = vmatprep.subr.bf16.mxu0 0
    %745 = vmatpush1.bf16.msra.mxu0 %v736
    %746 = vmatprep.subr.bf16.mxu0 0
    %747 = vmatpush1.bf16.msra.mxu0 0
    %748 = vmatprep.subr.bf16.mxu0 0
    %749 = vmatpush1.bf16.msra.mxu0 0
    %750 = vmatprep.subr.bf16.mxu0 0
    %751 = vmatpush1.bf16.msra.mxu0 0
    %752 = vmatprep.subr.bf16.mxu0 0
    %753 = vmatpush1.bf16.msra.mxu0 0
    %754 = vmatprep.subr.bf16.mxu0 0
    %755 = vmatpush1.bf16.msra.mxu0 0
    %756 = vmatprep.subr.bf16.mxu0 0
    %757 = vmatpush1.bf16.msra.mxu0 0
    %758 = vmatprep.subr.bf16.mxu0 0
    %759 = vmatpush1.bf16.msra.mxu0 0
    %760 = vmatprep.subr.bf16.mxu0 0
    %761 = vmatpush1.bf16.msra.mxu0 0
    %762 = vmatprep.subr.bf16.mxu0 0
    %763 = vmatpush1.bf16.msra.mxu0 0
    %764 = vmatprep.subr.bf16.mxu0 0
    %765 = vmatpush1.bf16.msra.mxu0 0
    %766 = vmatprep.subr.bf16.mxu0 0
    %767 = vmatpush1.bf16.msra.mxu0 0
    %768 = vmatprep.subr.bf16.mxu0 0
    %769 = vmatpush1.bf16.msra.mxu0 0
    %770 = vmatprep.subr.bf16.mxu0 0
    %771 = vmatpush1.bf16.msra.mxu0 0
    %772 = vmatprep.subr.bf16.mxu0 0
    %773 = vmatpush1.bf16.msra.mxu0 0
    %774 = vmatprep.mubr.bf16.mxu0 0
    %775 = vmatmul.mubr.bf16.gmra.mrb[0].mxu0 %v740
    %v776 = vpop.f32.mrb[0].mxu0
    %v777 = vadd.f32 0.0, %v776
    %v778 = vpop.f32.mrb[0].mxu0
    %v779 = vpop.f32.mrb[0].mxu0
    %v780 = vadd.f32 0.0, %v779
    %v781 = vpop.f32.mrb[0].mxu0
    %782 = vdwg.mxu0
    %v787 = vunpack.c.l.b16 %v717
    %v788 = vunpack.c.l.b16 %v718
    %v789 = vunpack.c.l.b16 %v719
    %v790 = vunpack.c.l.b16 %v720
    %v791 = vpack.c.b16 %v788, %v787
    %v792 = vpack.c.b16 %v790, %v789
    %v796 = vsel %vm116, %v721, 0
    %798 = vmatprep.subr.bf16.mxu0 0
    %799 = vmatpush1.bf16.msra.mxu0 %v791
    %800 = vmatprep.subr.bf16.mxu0 0
    %801 = vmatpush1.bf16.msra.mxu0 %v792
    %802 = vmatprep.subr.bf16.mxu0 0
    %803 = vmatpush1.bf16.msra.mxu0 0
    %804 = vmatprep.subr.bf16.mxu0 0
    %805 = vmatpush1.bf16.msra.mxu0 0
    %806 = vmatprep.subr.bf16.mxu0 0
    %807 = vmatpush1.bf16.msra.mxu0 0
    %808 = vmatprep.subr.bf16.mxu0 0
    %809 = vmatpush1.bf16.msra.mxu0 0
    %810 = vmatprep.subr.bf16.mxu0 0
    %811 = vmatpush1.bf16.msra.mxu0 0
    %812 = vmatprep.subr.bf16.mxu0 0
    %813 = vmatpush1.bf16.msra.mxu0 0
    %814 = vmatprep.subr.bf16.mxu0 0
    %815 = vmatpush1.bf16.msra.mxu0 0
    %816 = vmatprep.subr.bf16.mxu0 0
    %817 = vmatpush1.bf16.msra.mxu0 0
    %818 = vmatprep.subr.bf16.mxu0 0
    %819 = vmatpush1.bf16.msra.mxu0 0
    %820 = vmatprep.subr.bf16.mxu0 0
    %821 = vmatpush1.bf16.msra.mxu0 0
    %822 = vmatprep.subr.bf16.mxu0 0
    %823 = vmatpush1.bf16.msra.mxu0 0
    %824 = vmatprep.subr.bf16.mxu0 0
    %825 = vmatpush1.bf16.msra.mxu0 0
    %826 = vmatprep.subr.bf16.mxu0 0
    %827 = vmatpush1.bf16.msra.mxu0 0
    %828 = vmatprep.subr.bf16.mxu0 0
    %829 = vmatpush1.bf16.msra.mxu0 0
    %830 = vmatprep.mubr.bf16.mxu0 0
    %831 = vmatmul.mubr.bf16.gmra.mrb[0].mxu0 %v796
    %v832 = vpop.f32.mrb[0].mxu0
    %v833 = vadd.f32 %v777, %v832
    %v834 = vpop.f32.mrb[0].mxu0
    %v835 = vpop.f32.mrb[0].mxu0
    %v836 = vadd.f32 %v780, %v835
    %v837 = vpop.f32.mrb[0].mxu0
    %838 = vdwg.mxu0
    %v839 = vld [vmem:[%s3 + $0x6] sm:$0x1]
    %v840 = vlaneseq
    %v841 = vshrl.u32 %v840, 7
    %v842 = vsub.s32 0, %v841
    %v843 = vrot.slane %v839, %v842
    %v844 = vadd.f32 %v833, %v843
    %v845 = vadd.f32 %v836, %v843
    %vm846 = vcmp.gt.f32.partialorder %v844, 0.0
    %vm847 = vcmp.gt.f32.partialorder %v845, 0.0
    %v848 = vmul.f32 %v844, 0.01
    %v849 = vmul.f32 %v845, 0.01
    %v850 = vsel %vm846, %v844, %v848
    %v851 = vsel %vm847, %v845, %v849
    %v852 = vadd.f32 %v850, %v488
    %v853 = vadd.f32 %v851, %v489
    %854 = vmatprep.subr.bf16.mxu0 0
    %855 = vmatpush1.bf16.msra.mxu0 %v726
    %856 = vmatprep.subr.bf16.mxu0 0
    %857 = vmatpush1.bf16.msra.mxu0 0
    %858 = vmatprep.subr.bf16.mxu0 0
    %859 = vmatpush1.bf16.msra.mxu0 0
    %860 = vmatprep.subr.bf16.mxu0 0
    %861 = vmatpush1.bf16.msra.mxu0 0
    %862 = vmatprep.subr.bf16.mxu0 0
    %863 = vmatpush1.bf16.msra.mxu0 0
    %864 = vmatprep.subr.bf16.mxu0 0
    %865 = vmatpush1.bf16.msra.mxu0 0
    %866 = vmatprep.subr.bf16.mxu0 0
    %867 = vmatpush1.bf16.msra.mxu0 0
    %868 = vmatprep.subr.bf16.mxu0 0
    %869 = vmatpush1.bf16.msra.mxu0 0
    %870 = vmatprep.subr.bf16.mxu0 0
    %871 = vmatpush1.bf16.msra.mxu0 0
    %872 = vmatprep.subr.bf16.mxu0 0
    %873 = vmatpush1.bf16.msra.mxu0 0
    %874 = vmatprep.subr.bf16.mxu0 0
    %875 = vmatpush1.bf16.msra.mxu0 0
    %876 = vmatprep.subr.bf16.mxu0 0
    %877 = vmatpush1.bf16.msra.mxu0 0
    %878 = vmatprep.subr.bf16.mxu0 0
    %879 = vmatpush1.bf16.msra.mxu0 0
    %880 = vmatprep.subr.bf16.mxu0 0
    %881 = vmatpush1.bf16.msra.mxu0 0
    %882 = vmatprep.subr.bf16.mxu0 0
    %883 = vmatpush1.bf16.msra.mxu0 0
    %884 = vmatprep.subr.bf16.mxu0 0
    %885 = vmatpush1.bf16.msra.mxu0 0
    %886 = vmatprep.mubr.bf16.mxu0 0
    %887 = vmatmul.mubr.bf16.gmra.mrb[0].mxu0 %v496
    %v888 = vpop.f32.mrb[0].mxu0
    %v889 = vadd.f32 0.0, %v888
    %v890 = vpop.f32.mrb[0].mxu0
    %v891 = vpop.f32.mrb[0].mxu0
    %v892 = vadd.f32 0.0, %v891
    %v893 = vpop.f32.mrb[0].mxu0
    %894 = vdwg.mxu0
    %v895 = vld [vmem:[%s2 + $0x90] sm:$0xf]
    %v896 = vld [vmem:[%s2 + $0x94] sm:$0xf]
    %v897 = vld [vmem:[%s2 + $0x98] sm:$0xf]
    %v898 = vld [vmem:[%s2 + $0x9c] sm:$0xf]
    %v899 = vpack.c.bf16 %v892, %v889
    %v900 = vld [vmem:[%s2 + $0xa0] sm:$0xf]
    %v901 = vld [vmem:[%s2 + $0xa4] sm:$0xf]
    %v902 = vld [vmem:[%s2 + $0xa8] sm:$0xf]
    %v903 = vld [vmem:[%s2 + $0xac] sm:$0xf]
    %v908 = vunpack.c.l.b16 %v900
    %v909 = vunpack.c.l.b16 %v901
    %v910 = vunpack.c.l.b16 %v902
    %v911 = vunpack.c.l.b16 %v903
    %v912 = vpack.c.b16 %v909, %v908
    %v913 = vpack.c.b16 %v911, %v910
    %v917 = vsel %vm116, %v675, 0
    %919 = vmatprep.subr.bf16.mxu0 0
    %920 = vmatpush1.bf16.msra.mxu0 %v912
    %921 = vmatprep.subr.bf16.mxu0 0
    %922 = vmatpush1.bf16.msra.mxu0 %v913
    %923 = vmatprep.subr.bf16.mxu0 0
    %924 = vmatpush1.bf16.msra.mxu0 0
    %925 = vmatprep.subr.bf16.mxu0 0
    %926 = vmatpush1.bf16.msra.mxu0 0
    %927 = vmatprep.subr.bf16.mxu0 0
    %928 = vmatpush1.bf16.msra.mxu0 0
    %929 = vmatprep.subr.bf16.mxu0 0
    %930 = vmatpush1.bf16.msra.mxu0 0
    %931 = vmatprep.subr.bf16.mxu0 0
    %932 = vmatpush1.bf16.msra.mxu0 0
    %933 = vmatprep.subr.bf16.mxu0 0
    %934 = vmatpush1.bf16.msra.mxu0 0
    %935 = vmatprep.subr.bf16.mxu0 0
    %936 = vmatpush1.bf16.msra.mxu0 0
    %937 = vmatprep.subr.bf16.mxu0 0
    %938 = vmatpush1.bf16.msra.mxu0 0
    %939 = vmatprep.subr.bf16.mxu0 0
    %940 = vmatpush1.bf16.msra.mxu0 0
    %941 = vmatprep.subr.bf16.mxu0 0
    %942 = vmatpush1.bf16.msra.mxu0 0
    %943 = vmatprep.subr.bf16.mxu0 0
    %944 = vmatpush1.bf16.msra.mxu0 0
    %945 = vmatprep.subr.bf16.mxu0 0
    %946 = vmatpush1.bf16.msra.mxu0 0
    %947 = vmatprep.subr.bf16.mxu0 0
    %948 = vmatpush1.bf16.msra.mxu0 0
    %949 = vmatprep.subr.bf16.mxu0 0
    %950 = vmatpush1.bf16.msra.mxu0 0
    %951 = vmatprep.mubr.bf16.mxu0 0
    %952 = vmatmul.mubr.bf16.gmra.mrb[0].mxu0 %v917
    %v953 = vpop.f32.mrb[0].mxu0
    %v954 = vadd.f32 0.0, %v953
    %v955 = vpop.f32.mrb[0].mxu0
    %v956 = vpop.f32.mrb[0].mxu0
    %v957 = vadd.f32 0.0, %v956
    %v958 = vpop.f32.mrb[0].mxu0
    %959 = vdwg.mxu0
    %v964 = vunpack.c.l.b16 %v895
    %v965 = vunpack.c.l.b16 %v896
    %v966 = vunpack.c.l.b16 %v897
    %v967 = vunpack.c.l.b16 %v898
    %v968 = vpack.c.b16 %v965, %v964
    %v969 = vpack.c.b16 %v967, %v966
    %v973 = vsel %vm116, %v899, 0
    %975 = vmatprep.subr.bf16.mxu0 0
    %976 = vmatpush1.bf16.msra.mxu0 %v968
    %977 = vmatprep.subr.bf16.mxu0 0
    %978 = vmatpush1.bf16.msra.mxu0 %v969
    %979 = vmatprep.subr.bf16.mxu0 0
    %980 = vmatpush1.bf16.msra.mxu0 0
    %981 = vmatprep.subr.bf16.mxu0 0
    %982 = vmatpush1.bf16.msra.mxu0 0
    %983 = vmatprep.subr.bf16.mxu0 0
    %984 = vmatpush1.bf16.msra.mxu0 0
    %985 = vmatprep.subr.bf16.mxu0 0
    %986 = vmatpush1.bf16.msra.mxu0 0
    %987 = vmatprep.subr.bf16.mxu0 0
    %988 = vmatpush1.bf16.msra.mxu0 0
    %989 = vmatprep.subr.bf16.mxu0 0
    %990 = vmatpush1.bf16.msra.mxu0 0
    %991 = vmatprep.subr.bf16.mxu0 0
    %992 = vmatpush1.bf16.msra.mxu0 0
    %993 = vmatprep.subr.bf16.mxu0 0
    %994 = vmatpush1.bf16.msra.mxu0 0
    %995 = vmatprep.subr.bf16.mxu0 0
    %996 = vmatpush1.bf16.msra.mxu0 0
    %997 = vmatprep.subr.bf16.mxu0 0
    %998 = vmatpush1.bf16.msra.mxu0 0
    %999 = vmatprep.subr.bf16.mxu0 0
    %1000 = vmatpush1.bf16.msra.mxu0 0
    %1001 = vmatprep.subr.bf16.mxu0 0
    %1002 = vmatpush1.bf16.msra.mxu0 0
    %1003 = vmatprep.subr.bf16.mxu0 0
    %1004 = vmatpush1.bf16.msra.mxu0 0
    %1005 = vmatprep.subr.bf16.mxu0 0
    %1006 = vmatpush1.bf16.msra.mxu0 0
    %1007 = vmatprep.mubr.bf16.mxu0 0
    %1008 = vmatmul.mubr.bf16.gmra.mrb[0].mxu0 %v973
    %v1009 = vpop.f32.mrb[0].mxu0
    %v1010 = vadd.f32 %v954, %v1009
    %v1011 = vpop.f32.mrb[0].mxu0
    %v1012 = vpop.f32.mrb[0].mxu0
    %v1013 = vadd.f32 %v957, %v1012
    %v1014 = vpop.f32.mrb[0].mxu0
    %1015 = vdwg.mxu0
    %v1016 = vld [vmem:[%s3 + $0x7] sm:$0x1]
    %v1017 = vlaneseq
    %v1018 = vshrl.u32 %v1017, 7
    %v1019 = vsub.s32 0, %v1018
    %v1020 = vrot.slane %v1016, %v1019
    %v1021 = vadd.f32 %v1010, %v1020
    %v1022 = vadd.f32 %v1013, %v1020
    %vm1023 = vcmp.gt.f32.partialorder %v1021, 0.0
    %vm1024 = vcmp.gt.f32.partialorder %v1022, 0.0
    %v1025 = vmul.f32 %v1021, 0.01
    %v1026 = vmul.f32 %v1022, 0.01
    %v1027 = vsel %vm1023, %v1021, %v1025
    %v1028 = vsel %vm1024, %v1022, %v1026
    %v1029 = vadd.f32 %v1027, %v673
    %v1030 = vadd.f32 %v1028, %v674
    %v1031 = vld [vmem:[%s2 + $0xb0] sm:$0xf]
    %v1032 = vld [vmem:[%s2 + $0xb4] sm:$0xf]
    %v1033 = vld [vmem:[%s2 + $0xb8] sm:$0xf]
    %v1034 = vld [vmem:[%s2 + $0xbc] sm:$0xf]
    %v1035 = vpack.c.bf16 %v853, %v852
    %v1036 = vld [vmem:[%s3 + $0x8] sm:$0x1]
    %v1037 = vlaneseq
    %v1038 = vshrl.u32 %v1037, 7
    %v1039 = vsub.s32 0, %v1038
    %v1040 = vrot.slane %v1036, %v1039
    %v1045 = vunpack.c.l.b16 %v1031
    %v1046 = vunpack.c.l.b16 %v1032
    %v1047 = vunpack.c.l.b16 %v1033
    %v1048 = vunpack.c.l.b16 %v1034
    %v1049 = vpack.c.b16 %v1046, %v1045
    %v1050 = vpack.c.b16 %v1048, %v1047
    %v1054 = vsel %vm116, %v1035, 0
    %1056 = vmatprep.subr.bf16.mxu0 0
    %1057 = vmatpush1.bf16.msra.mxu0 %v1049
    %1058 = vmatprep.subr.bf16.mxu0 0
    %1059 = vmatpush1.bf16.msra.mxu0 %v1050
    %1060 = vmatprep.subr.bf16.mxu0 0
    %1061 = vmatpush1.bf16.msra.mxu0 0
    %1062 = vmatprep.subr.bf16.mxu0 0
    %1063 = vmatpush1.bf16.msra.mxu0 0
    %1064 = vmatprep.subr.bf16.mxu0 0
    %1065 = vmatpush1.bf16.msra.mxu0 0
    %1066 = vmatprep.subr.bf16.mxu0 0
    %1067 = vmatpush1.bf16.msra.mxu0 0
    %1068 = vmatprep.subr.bf16.mxu0 0
    %1069 = vmatpush1.bf16.msra.mxu0 0
    %1070 = vmatprep.subr.bf16.mxu0 0
    %1071 = vmatpush1.bf16.msra.mxu0 0
    %1072 = vmatprep.subr.bf16.mxu0 0
    %1073 = vmatpush1.bf16.msra.mxu0 0
    %1074 = vmatprep.subr.bf16.mxu0 0
    %1075 = vmatpush1.bf16.msra.mxu0 0
    %1076 = vmatprep.subr.bf16.mxu0 0
    %1077 = vmatpush1.bf16.msra.mxu0 0
    %1078 = vmatprep.subr.bf16.mxu0 0
    %1079 = vmatpush1.bf16.msra.mxu0 0
    %1080 = vmatprep.subr.bf16.mxu0 0
    %1081 = vmatpush1.bf16.msra.mxu0 0
    %1082 = vmatprep.subr.bf16.mxu0 0
    %1083 = vmatpush1.bf16.msra.mxu0 0
    %1084 = vmatprep.subr.bf16.mxu0 0
    %1085 = vmatpush1.bf16.msra.mxu0 0
    %1086 = vmatprep.subr.bf16.mxu0 0
    %1087 = vmatpush1.bf16.msra.mxu0 0
    %1088 = vmatprep.mubr.bf16.mxu0 0
    %1089 = vmatmul.mubr.bf16.gmra.mrb[0].mxu0 %v1054
    %v1090 = vpop.f32.mrb[0].mxu0
    %v1091 = vadd.f32 %v1040, %v1090
    %v1092 = vpop.f32.mrb[0].mxu0
    %v1093 = vpop.f32.mrb[0].mxu0
    %v1094 = vadd.f32 %v1040, %v1093
    %v1095 = vpop.f32.mrb[0].mxu0
    %1096 = vdwg.mxu0
    %vm1097 = vcmp.gt.f32.partialorder %v1091, 0.0
    %vm1098 = vcmp.gt.f32.partialorder %v1094, 0.0
    %v1099 = vmul.f32 %v1091, 0.01
    %v1100 = vmul.f32 %v1094, 0.01
    %v1101 = vsel %vm1097, %v1091, %v1099
    %v1102 = vsel %vm1098, %v1094, %v1100
    %v1103 = vld [vmem:[%s2 + $0xc0] sm:$0xf]
    %v1104 = vld [vmem:[%s2 + $0xc4] sm:$0xf]
    %v1105 = vld [vmem:[%s2 + $0xc8] sm:$0xf]
    %v1106 = vld [vmem:[%s2 + $0xcc] sm:$0xf]
    %v1107 = vpack.c.bf16 %v1102, %v1101
    %v1108 = vld [vmem:[%s3 + $0x9] sm:$0x1]
    %v1109 = vlaneseq
    %v1110 = vshrl.u32 %v1109, 7
    %v1111 = vsub.s32 0, %v1110
    %v1112 = vrot.slane %v1108, %v1111
    %v1117 = vunpack.c.l.b16 %v1103
    %v1118 = vunpack.c.l.b16 %v1104
    %v1119 = vunpack.c.l.b16 %v1105
    %v1120 = vunpack.c.l.b16 %v1106
    %v1121 = vpack.c.b16 %v1118, %v1117
    %v1122 = vpack.c.b16 %v1120, %v1119
    %v1126 = vsel %vm116, %v1107, 0
    %1128 = vmatprep.subr.bf16.mxu0 0
    %1129 = vmatpush1.bf16.msra.mxu0 %v1121
    %1130 = vmatprep.subr.bf16.mxu0 0
    %1131 = vmatpush1.bf16.msra.mxu0 %v1122
    %1132 = vmatprep.subr.bf16.mxu0 0
    %1133 = vmatpush1.bf16.msra.mxu0 0
    %1134 = vmatprep.subr.bf16.mxu0 0
    %1135 = vmatpush1.bf16.msra.mxu0 0
    %1136 = vmatprep.subr.bf16.mxu0 0
    %1137 = vmatpush1.bf16.msra.mxu0 0
    %1138 = vmatprep.subr.bf16.mxu0 0
    %1139 = vmatpush1.bf16.msra.mxu0 0
    %1140 = vmatprep.subr.bf16.mxu0 0
    %1141 = vmatpush1.bf16.msra.mxu0 0
    %1142 = vmatprep.subr.bf16.mxu0 0
    %1143 = vmatpush1.bf16.msra.mxu0 0
    %1144 = vmatprep.subr.bf16.mxu0 0
    %1145 = vmatpush1.bf16.msra.mxu0 0
    %1146 = vmatprep.subr.bf16.mxu0 0
    %1147 = vmatpush1.bf16.msra.mxu0 0
    %1148 = vmatprep.subr.bf16.mxu0 0
    %1149 = vmatpush1.bf16.msra.mxu0 0
    %1150 = vmatprep.subr.bf16.mxu0 0
    %1151 = vmatpush1.bf16.msra.mxu0 0
    %1152 = vmatprep.subr.bf16.mxu0 0
    %1153 = vmatpush1.bf16.msra.mxu0 0
    %1154 = vmatprep.subr.bf16.mxu0 0
    %1155 = vmatpush1.bf16.msra.mxu0 0
    %1156 = vmatprep.subr.bf16.mxu0 0
    %1157 = vmatpush1.bf16.msra.mxu0 0
    %1158 = vmatprep.subr.bf16.mxu0 0
    %1159 = vmatpush1.bf16.msra.mxu0 0
    %1160 = vmatprep.mubr.bf16.mxu0 0
    %1161 = vmatmul.mubr.bf16.gmra.mrb[0].mxu0 %v1126
    %v1162 = vpop.f32.mrb[0].mxu0
    %v1163 = vadd.f32 %v1112, %v1162
    %v1164 = vpop.f32.mrb[0].mxu0
    %v1165 = vpop.f32.mrb[0].mxu0
    %v1166 = vadd.f32 %v1112, %v1165
    %v1167 = vpop.f32.mrb[0].mxu0
    %1168 = vdwg.mxu0
    %v1169 = vmul.f32 %v1163, %v1163
    %v1170 = vmul.f32 %v1166, %v1166
    %v1171 = vsel %vm116, %v1169, 0.0
    %1172 = vadd.xlane.f32.xlu0 %v1171
    %v1173 = vpop.xlane.xlu0 %1172
    %v1174 = vsel %vm116, %v1170, 0.0
    %1175 = vadd.xlane.f32.xlu0 %v1174
    %v1176 = vpop.xlane.xlu0 %1175
    %v1177 = vmax.f32 %v1173, 1e-24
    %v1178 = vmax.f32 %v1176, 1e-24
    %v1179 = vrsqrt.pop %v1177
    %v1180 = vrsqrt.pop %v1178
    %v1181 = vmul.f32 %v1163, %v1179
    %v1182 = vmul.f32 %v1166, %v1180
    %v1183 = vld [vmem:[%s2 + $0xd0] sm:$0xf]
    %v1184 = vld [vmem:[%s2 + $0xd4] sm:$0xf]
    %v1185 = vld [vmem:[%s2 + $0xd8] sm:$0xf]
    %v1186 = vld [vmem:[%s2 + $0xdc] sm:$0xf]
    %v1187 = vpack.c.bf16 %v1030, %v1029
    %v1188 = vld [vmem:[%s3 + $0xa] sm:$0x1]
    %v1189 = vlaneseq
    %v1190 = vshrl.u32 %v1189, 7
    %v1191 = vsub.s32 0, %v1190
    %v1192 = vrot.slane %v1188, %v1191
    %v1197 = vunpack.c.l.b16 %v1183
    %v1198 = vunpack.c.l.b16 %v1184
    %v1199 = vunpack.c.l.b16 %v1185
    %v1200 = vunpack.c.l.b16 %v1186
    %v1201 = vpack.c.b16 %v1198, %v1197
    %v1202 = vpack.c.b16 %v1200, %v1199
    %v1206 = vsel %vm116, %v1187, 0
    %1208 = vmatprep.subr.bf16.mxu0 0
    %1209 = vmatpush1.bf16.msra.mxu0 %v1201
    %1210 = vmatprep.subr.bf16.mxu0 0
    %1211 = vmatpush1.bf16.msra.mxu0 %v1202
    %1212 = vmatprep.subr.bf16.mxu0 0
    %1213 = vmatpush1.bf16.msra.mxu0 0
    %1214 = vmatprep.subr.bf16.mxu0 0
    %1215 = vmatpush1.bf16.msra.mxu0 0
    %1216 = vmatprep.subr.bf16.mxu0 0
    %1217 = vmatpush1.bf16.msra.mxu0 0
    %1218 = vmatprep.subr.bf16.mxu0 0
    %1219 = vmatpush1.bf16.msra.mxu0 0
    %1220 = vmatprep.subr.bf16.mxu0 0
    %1221 = vmatpush1.bf16.msra.mxu0 0
    %1222 = vmatprep.subr.bf16.mxu0 0
    %1223 = vmatpush1.bf16.msra.mxu0 0
    %1224 = vmatprep.subr.bf16.mxu0 0
    %1225 = vmatpush1.bf16.msra.mxu0 0
    %1226 = vmatprep.subr.bf16.mxu0 0
    %1227 = vmatpush1.bf16.msra.mxu0 0
    %1228 = vmatprep.subr.bf16.mxu0 0
    %1229 = vmatpush1.bf16.msra.mxu0 0
    %1230 = vmatprep.subr.bf16.mxu0 0
    %1231 = vmatpush1.bf16.msra.mxu0 0
    %1232 = vmatprep.subr.bf16.mxu0 0
    %1233 = vmatpush1.bf16.msra.mxu0 0
    %1234 = vmatprep.subr.bf16.mxu0 0
    %1235 = vmatpush1.bf16.msra.mxu0 0
    %1236 = vmatprep.subr.bf16.mxu0 0
    %1237 = vmatpush1.bf16.msra.mxu0 0
    %1238 = vmatprep.subr.bf16.mxu0 0
    %1239 = vmatpush1.bf16.msra.mxu0 0
    %1240 = vmatprep.mubr.bf16.mxu0 0
    %1241 = vmatmul.mubr.bf16.gmra.mrb[0].mxu0 %v1206
    %v1242 = vpop.f32.mrb[0].mxu0
    %v1243 = vadd.f32 %v1192, %v1242
    %v1244 = vpop.f32.mrb[0].mxu0
    %v1245 = vpop.f32.mrb[0].mxu0
    %v1246 = vadd.f32 %v1192, %v1245
    %v1247 = vpop.f32.mrb[0].mxu0
    %1248 = vdwg.mxu0
    %vm1249 = vcmp.gt.f32.partialorder %v1243, 0.0
    %vm1250 = vcmp.gt.f32.partialorder %v1246, 0.0
    %v1251 = vmul.f32 %v1243, 0.01
    %v1252 = vmul.f32 %v1246, 0.01
    %v1253 = vsel %vm1249, %v1243, %v1251
    %v1254 = vsel %vm1250, %v1246, %v1252
    %v1255 = vld [vmem:[%s2 + $0xe0] sm:$0xf]
    %v1256 = vld [vmem:[%s2 + $0xe4] sm:$0xf]
    %v1257 = vld [vmem:[%s2 + $0xe8] sm:$0xf]
    %v1258 = vld [vmem:[%s2 + $0xec] sm:$0xf]
    %v1259 = vpack.c.bf16 %v1254, %v1253
    %v1260 = vld [vmem:[%s3 + $0xb] sm:$0x1]
    %v1261 = vlaneseq
    %v1262 = vshrl.u32 %v1261, 7
    %v1263 = vsub.s32 0, %v1262
    %v1264 = vrot.slane %v1260, %v1263
    %v1269 = vunpack.c.l.b16 %v1255
    %v1270 = vunpack.c.l.b16 %v1256
    %v1271 = vunpack.c.l.b16 %v1257
    %v1272 = vunpack.c.l.b16 %v1258
    %v1273 = vpack.c.b16 %v1270, %v1269
    %v1274 = vpack.c.b16 %v1272, %v1271
    %v1278 = vsel %vm116, %v1259, 0
    %1280 = vmatprep.subr.bf16.mxu0 0
    %1281 = vmatpush1.bf16.msra.mxu0 %v1273
    %1282 = vmatprep.subr.bf16.mxu0 0
    %1283 = vmatpush1.bf16.msra.mxu0 %v1274
    %1284 = vmatprep.subr.bf16.mxu0 0
    %1285 = vmatpush1.bf16.msra.mxu0 0
    %1286 = vmatprep.subr.bf16.mxu0 0
    %1287 = vmatpush1.bf16.msra.mxu0 0
    %1288 = vmatprep.subr.bf16.mxu0 0
    %1289 = vmatpush1.bf16.msra.mxu0 0
    %1290 = vmatprep.subr.bf16.mxu0 0
    %1291 = vmatpush1.bf16.msra.mxu0 0
    %1292 = vmatprep.subr.bf16.mxu0 0
    %1293 = vmatpush1.bf16.msra.mxu0 0
    %1294 = vmatprep.subr.bf16.mxu0 0
    %1295 = vmatpush1.bf16.msra.mxu0 0
    %1296 = vmatprep.subr.bf16.mxu0 0
    %1297 = vmatpush1.bf16.msra.mxu0 0
    %1298 = vmatprep.subr.bf16.mxu0 0
    %1299 = vmatpush1.bf16.msra.mxu0 0
    %1300 = vmatprep.subr.bf16.mxu0 0
    %1301 = vmatpush1.bf16.msra.mxu0 0
    %1302 = vmatprep.subr.bf16.mxu0 0
    %1303 = vmatpush1.bf16.msra.mxu0 0
    %1304 = vmatprep.subr.bf16.mxu0 0
    %1305 = vmatpush1.bf16.msra.mxu0 0
    %1306 = vmatprep.subr.bf16.mxu0 0
    %1307 = vmatpush1.bf16.msra.mxu0 0
    %1308 = vmatprep.subr.bf16.mxu0 0
    %1309 = vmatpush1.bf16.msra.mxu0 0
    %1310 = vmatprep.subr.bf16.mxu0 0
    %1311 = vmatpush1.bf16.msra.mxu0 0
    %1312 = vmatprep.mubr.bf16.mxu0 0
    %1313 = vmatmul.mubr.bf16.gmra.mrb[0].mxu0 %v1278
    %v1314 = vpop.f32.mrb[0].mxu0
    %v1315 = vadd.f32 %v1264, %v1314
    %v1316 = vpop.f32.mrb[0].mxu0
    %v1317 = vpop.f32.mrb[0].mxu0
    %v1318 = vadd.f32 %v1264, %v1317
    %v1319 = vpop.f32.mrb[0].mxu0
    %1320 = vdwg.mxu0
    %v1321 = vmul.f32 %v1315, %v1315
    %v1322 = vmul.f32 %v1318, %v1318
    %v1323 = vsel %vm116, %v1321, 0.0
    %1324 = vadd.xlane.f32.xlu0 %v1323
    %v1325 = vpop.xlane.xlu0 %1324
    %v1326 = vsel %vm116, %v1322, 0.0
    %1327 = vadd.xlane.f32.xlu0 %v1326
    %v1328 = vpop.xlane.xlu0 %1327
    %v1329 = vmax.f32 %v1325, 1e-24
    %v1330 = vmax.f32 %v1328, 1e-24
    %v1331 = vrsqrt.pop %v1329
    %v1332 = vrsqrt.pop %v1330
    %v1333 = vmul.f32 %v1315, %v1331
    %v1334 = vmul.f32 %v1318, %v1332
    %1337 = vrot.lane.b32.xlu0 %v1333, 32
    %v1338 = vpop.permute.xlu0 %1337
    %1339 = vrot.lane.b32.xlu0 %v1334, 32
    %v1340 = vpop.permute.xlu0 %1339
    %v1343 = vsel %vm116, %v1181, %v1338
    %v1344 = vsel %vm116, %v1182, %v1340
    %vm1345 = vcmask 523264
    %v1346 = vsel %vm1345, %v1343, 0.0
    %v1347 = vsel %vm1345, %v1344, 0.0
    %1348 = vst [vmem:[#allocation2] sm:$0xff] %v1346
    %1349 = vst [vmem:[#allocation2 + $0x8] sm:$0xff] %v1347
    // Predicated region
    $region18: #{tpu_custom_call.1} parent=1 // pred_check
      _
    $region19: #{tpu_custom_call.1} parent=1 // pred_check_branch
      %1351 = sbr.rel (0) target = $region21
    $region20: #{tpu_custom_call.1} parent=1 // pred_region
      %s1353 = ssub.s32 256, 256
      %1354 = vsyncadd [#allocation3], %s1353
      %s1355 = sshll.u32 [#allocation2], 4
      %s1356 = int_to_ptr.vmem [resolvable:$true] %s1355
      %1361 = dma.vmem_to_hbm [thread:$0]  %s1356, 256, %s4, [#allocation3], 128, 128, 8
    $region21: #{tpu_custom_call.1} parent=1 // pred_fallthru
      _
    // Predicated region
    $region22: #{tpu_custom_call.1} parent=1 // pred_check
      _
    $region23: #{tpu_custom_call.1} parent=1 // pred_check_branch
      %1363 = sbr.rel (0) target = $region25
    $region24: #{tpu_custom_call.1} parent=1 // pred_region
      %1364 = dma.done [#allocation3], 256
    $region25: #{tpu_custom_call.1} parent=1 // pred_fallthru
      _
    %1365 = vsyncpa [#allocation3], 1

</llo_original>
